<compile_context>
chip_gen: v7x
topology: tpu7x:2x2x1
jax: 0.10.0
libtpu: 0.0.40
codegen_flags: <defaults>
</compile_context>

<pallas_src>
import jax
import jax.numpy as jnp
from jax.experimental import pallas as pl
from jax.experimental.pallas import tpu as pltpu

_NEG = -1e30  # "minus infinity" that stays finite in f32 arithmetic


def _round_up(x, m):
    return ((x + m - 1) // m) * m


def _vmem_capacity_bytes():
    try:
        return int(pltpu.get_tpu_info().vmem_capacity_bytes)
    except Exception:
        return 64 * 1024 * 1024  # conservative fallback (v7x per-TC VMEM)


def _pick_vocab_tile(Hp, V, w_bytes, max_batch):
    """Largest 128-multiple vocab tile whose double-buffered working set fits VMEM."""
    vmin = _round_up(V, 128)
    Bp = max(8, _round_up(max_batch, 8))
    budget = int(0.7 * _vmem_capacity_bytes())
    resident = (2 * Hp * 3 * Hp * 4        # fused GRU weights (f32, single-buffered)
                + 4 * Hp * 4               # fused biases
                + 4 * Bp * Hp * 4          # h0 / h_new / x / hn buffers
                + 8 * Bp * 4)              # m / l / lse
    per_col = 2 * (Hp * w_bytes + 4 + Bp * 4)  # dbl-buffered W_out col + b_out + logits out
    tn = max(128, ((budget - resident) // per_col) // 128 * 128)
    tn = min(tn, 16384, vmin)
    # Pad Vp up to a multiple of tn (never shrink tn toward 128-wide tiles), but
    # back the tile off in halves (not below 2048) if the padding would waste
    # more than 12.5% of the streamed W_out bytes.
    while tn > 2048 and (_round_up(V, tn) - vmin) * 8 > vmin:
        tn = _round_up(tn // 2, 128)
    return tn


def _resident_spec(shape):
    """Grid-invariant input block, single-buffered when the API supports it."""
    index_map = lambda j, *_: (0,) * len(shape)
    if hasattr(pl, "Buffered"):
        try:
            return pl.BlockSpec(shape, index_map, pipeline_mode=pl.Buffered(1))
        except TypeError:
            pass
    return pl.BlockSpec(shape, index_map)


def _decoder_step_kernel(
    ids_ref,                            # SMEM (Bp,) int32 token ids (scalar prefetch)
    emb_ref,                            # HBM  (V, Hp) f32 embedding table (pl.ANY)
    h_ref,                              # VMEM (Bp, Hp) f32 previous hidden (resident)
    w_i_ref, w_h_ref,                   # VMEM (Hp, 3Hp) fused GRU weights (resident, f32)
    b_i_ref, b_hn_ref,                  # VMEM (1, 3Hp) / (1, Hp) fused biases (resident)
    w_out_ref, b_out_ref,               # VMEM (Hp, tn) / (1, tn) vocab tile (pipelined)
    logits_ref, lse_ref, h_new_ref,     # outputs: (Bp, tn) tile, (Bp, 1), (Bp, Hp)
    x_scr, hn_scr, m_scr, l_scr, dma_sem,
):
    j = pl.program_id(0)
    nv = pl.num_programs(0)
    hp = h_ref.shape[1]
    f32 = jnp.float32

    # ---- GRU cell: only at the first vocab tile; results stay VMEM-resident. ----
    @pl.when(j == 0)
    def _():
        # Fused embedding gather: one small row DMA per batch element.
        bp = x_scr.shape[0]
        copies = []
        for b in range(bp):  # static unroll; decode batches are small
            cp = pltpu.make_async_copy(
                emb_ref.at[pl.ds(ids_ref[b], 1)],
                x_scr.at[pl.ds(b, 1)],
                dma_sem.at[b])
            cp.start()
            copies.append(cp)
        for cp in copies:
            cp.wait()

        # Dropout is identity in eval mode; ReLU on the embedded input.
        # TODO(synk): training-mode dropout (p=0.5) would need pltpu.prng_* masking.
        x = jnp.maximum(x_scr[...], 0.0)
        h = h_ref[...]
        gi = jnp.dot(x, w_i_ref[...], preferred_element_type=f32) + b_i_ref[...]
        gh = jnp.dot(h, w_h_ref[...], preferred_element_type=f32)

        gi_r, gi_z, gi_n = gi[:, :hp], gi[:, hp:2 * hp], gi[:, 2 * hp:]
        gh_r, gh_z, gh_n = gh[:, :hp], gh[:, hp:2 * hp], gh[:, 2 * hp:]

        r = jax.nn.sigmoid(gi_r + gh_r)          # b_ir + b_hr already fused into gi_r
        z = jax.nn.sigmoid(gi_z + gh_z)          # b_iz + b_hz already fused into gi_z
        n = jnp.tanh(gi_n + r * (gh_n + b_hn_ref[...]))
        h_new = (1.0 - z) * n + z * h

        h_new_ref[...] = h_new                    # recurrent state stays f32
        hn_scr[...] = h_new.astype(hn_scr.dtype)  # one cast, reused by every vocab tile
        m_scr[...] = jnp.full(m_scr.shape, _NEG, dtype=f32)
        l_scr[...] = jnp.zeros(l_scr.shape, f32)

    # ---- Vocab tile: logits + online log-sum-exp; tile writeback is pipelined. ----
    logits = jnp.dot(hn_scr[...], w_out_ref[...],
                     preferred_element_type=f32) + b_out_ref[...]
    logits_ref[...] = logits

    m_prev = m_scr[...]
    m_new = jnp.maximum(m_prev, jnp.max(logits, axis=1, keepdims=True))
    l_scr[...] = (l_scr[...] * jnp.exp(m_prev - m_new)
                  + jnp.sum(jnp.exp(logits - m_new), axis=1, keepdims=True))
    m_scr[...] = m_new

    @pl.when(j == nv - 1)
    def _():
        lse_ref[...] = m_scr[...] + jnp.log(l_scr[...])


def init_params(key, hidden_size, output_size):
    """Raw params in PyTorch layout (same shapes as the nn.Module)."""
    ks = jax.random.split(key, 7)
    H, V = hidden_size, output_size
    s = 1.0 / jnp.sqrt(H)
    return {
        "embedding": jax.random.normal(ks[0], (V, H), jnp.float32),
        "w_ih": jax.random.uniform(ks[1], (3 * H, H), jnp.float32, -s, s),
        "w_hh": jax.random.uniform(ks[2], (3 * H, H), jnp.float32, -s, s),
        "b_ih": jax.random.uniform(ks[3], (3 * H,), jnp.float32, -s, s),
        "b_hh": jax.random.uniform(ks[4], (3 * H,), jnp.float32, -s, s),
        "w_out": jax.random.uniform(ks[5], (V, H), jnp.float32, -s, s),
        "b_out": jax.random.uniform(ks[6], (V,), jnp.float32, -s, s),
    }


def prepare_params(params, hidden_size, output_size, *,
                   out_proj_dtype=jnp.float32, max_batch=8):
    """One-time layout prep: transpose, fuse gates/biases, pad to vreg tiles.

    out_proj_dtype: storage dtype for W_out only (bf16 recommended - it dominates
    streamed HBM bytes).  GRU weights and the recurrent hidden state stay f32 so
    an autoregressive decode does not accumulate rounding drift.
    TODO(synk): fp8 (v7x) / int8 (v6e, v5e) W_out with per-column scales for a
    further ~2x cut in streamed bytes.
    """
    H, V = hidden_size, output_size
    Hp = _round_up(H, 128)
    wb = jnp.dtype(out_proj_dtype).itemsize
    tn = _pick_vocab_tile(Hp, V, wb, max_batch)
    Vp = _round_up(V, tn)   # pad the vocab up to a tile multiple (never shrink the tile)

    def pad2(a, r, c):
        return jnp.pad(a, ((0, r - a.shape[0]), (0, c - a.shape[1])))

    def pad1(b):
        return jnp.pad(b, (0, Hp - b.shape[0]))

    w_ir, w_iz, w_in_ = jnp.split(params["w_ih"], 3, axis=0)   # (H, H) each
    w_hr, w_hz, w_hn = jnp.split(params["w_hh"], 3, axis=0)
    b_ir, b_iz, b_in_ = jnp.split(params["b_ih"], 3)
    b_hr, b_hz, b_hn = jnp.split(params["b_hh"], 3)

    def padT(w):  # (out,in) torch layout -> padded (in,out)
        return pad2(w.T, Hp, Hp)

    w_i_all = jnp.concatenate([padT(w_ir), padT(w_iz), padT(w_in_)], axis=1)  # (Hp, 3Hp)
    w_h_all = jnp.concatenate([padT(w_hr), padT(w_hz), padT(w_hn)], axis=1)   # (Hp, 3Hp)

    b_i_all = jnp.concatenate(
        [pad1(b_ir + b_hr), pad1(b_iz + b_hz), pad1(b_in_)]).reshape(1, 3 * Hp)
    b_hn_p = pad1(b_hn).reshape(1, Hp)

    w_out_p = pad2(params["w_out"].T, Hp, Vp)                                 # (Hp, Vp)
    # Padded vocab columns get a huge negative bias -> exp() == 0 in log-softmax.
    b_out_p = jnp.pad(params["b_out"], (0, Vp - V), constant_values=_NEG).reshape(1, Vp)

    return {
        "H": H, "V": V, "Hp": Hp, "Vp": Vp, "tn": tn,
        "embedding": jnp.pad(params["embedding"],
                             ((0, 0), (0, Hp - H))).astype(jnp.float32),
        "w_i_all": w_i_all.astype(jnp.float32),
        "w_h_all": w_h_all.astype(jnp.float32),
        "b_i_all": b_i_all.astype(jnp.float32),
        "b_hn": b_hn_p.astype(jnp.float32),
        "w_out": w_out_p.astype(out_proj_dtype),
        "b_out": b_out_p.astype(jnp.float32),
    }


def decoder_rnn_forward(prepped, input_tokens, hidden):
    """Mirrors DecoderRNN.forward(input, hidden, batch_size=B) in eval mode.

    input_tokens : int32 (B,)   token ids
    hidden       : f32   (1, B, H)
    returns      : (log_probs (B, V), hidden (1, B, H))
    """
    H, V, Hp, Vp, tn = (prepped[k] for k in ("H", "V", "Hp", "Vp", "tn"))
    B = input_tokens.shape[0]
    Bp = max(8, _round_up(B, 8))
    nv = Vp // tn

    # Glue: pad ids / hidden to vreg-aligned shapes (pad rows gather row 0; their
    # outputs are sliced off below).
    ids = jnp.pad(input_tokens.astype(jnp.int32), (0, Bp - B))
    h0 = jnp.pad(hidden[0].astype(jnp.float32), ((0, Bp - B), (0, Hp - H)))

    grid_spec = pltpu.PrefetchScalarGridSpec(
        num_scalar_prefetch=1,
        grid=(nv,),
        in_specs=[
            pl.BlockSpec(memory_space=pl.ANY),               # embedding table (HBM, DMA gather)
            _resident_spec((Bp, Hp)),                        # h0
            _resident_spec((Hp, 3 * Hp)),                    # W_i_all (f32)
            _resident_spec((Hp, 3 * Hp)),                    # W_h_all (f32)
            _resident_spec((1, 3 * Hp)),                     # b_i_all
            _resident_spec((1, Hp)),                         # b_hn
            pl.BlockSpec((Hp, tn), lambda j, ids: (0, j)),   # W_out vocab tile (pipelined)
            pl.BlockSpec((1, tn), lambda j, ids: (0, j)),    # b_out vocab tile
        ],
        out_specs=(
            pl.BlockSpec((Bp, tn), lambda j, ids: (0, j)),   # unnormalized logits (tiled writeback)
            pl.BlockSpec((Bp, 1), lambda j, ids: (0, 0)),    # log-sum-exp
            pl.BlockSpec((Bp, Hp), lambda j, ids: (0, 0)),   # new hidden state
        ),
        scratch_shapes=[
            pltpu.VMEM((Bp, Hp), jnp.float32),               # gathered embedding rows
            pltpu.VMEM((Bp, Hp), prepped["w_out"].dtype),    # h_new cast once to W_out dtype
            pltpu.VMEM((Bp, 1), jnp.float32),                # running max
            pltpu.VMEM((Bp, 1), jnp.float32),                # running sum-exp
            pltpu.SemaphoreType.DMA((Bp,)),                  # per-row gather semaphores
        ],
    )

    # VMEM budget: GRU weights single-buffered, W_out/b_out/logits double-buffered;
    # floor at 32 MiB (v5e default is 16 MiB), clamp to 90% of physical VMEM (v7x: 64 MiB).
    wb = jnp.dtype(prepped["w_out"].dtype).itemsize
    est_bytes = (
        2 * Hp * 3 * Hp * 4 + 4 * Hp * 4 + Bp * Hp * 4   # GRU weights, biases, h0
        + 2 * (Hp * tn * wb + tn * 4)                    # double-buffered W_out / b_out tiles
        + 2 * Bp * tn * 4                                # double-buffered logits output tiles
        + Bp * Hp * 4 + Bp * 4                           # resident h_new / lse outputs
        + Bp * Hp * (4 + wb) + 2 * Bp * 4                # x / hn / m / l scratch
    )
    vmem_limit = int(min(max(est_bytes * 1.3, 32 * 1024 * 1024),
                         0.9 * _vmem_capacity_bytes()))

    cost = pl.CostEstimate(
        flops=int(2 * Bp * Hp * (6 * Hp + Vp)),
        transcendentals=int(Bp * (Vp + 4 * Hp)),
        bytes_accessed=int(Hp * Vp * wb + 6 * Hp * Hp * 4
                           + 3 * Bp * Vp * 4 + 3 * Bp * Hp * 4),
    )

    # TODO(synk): on v7x, shard the vocab sweep across the two TensorCores (leading
    # "parallel" grid axis, per-core lse halves combined in the wrapper) for ~2x.
    logits_pad, lse, h_new_pad = pl.pallas_call(
        _decoder_step_kernel,
        out_shape=(
            jax.ShapeDtypeStruct((Bp, Vp), jnp.float32),
            jax.ShapeDtypeStruct((Bp, 1), jnp.float32),
            jax.ShapeDtypeStruct((Bp, Hp), jnp.float32),
        ),
        grid_spec=grid_spec,
        compiler_params=pltpu.CompilerParams(
            dimension_semantics=("arbitrary",), vmem_limit_bytes=vmem_limit),
        cost_estimate=cost,
    )(ids, prepped["embedding"], h0,
      prepped["w_i_all"], prepped["w_h_all"], prepped["b_i_all"], prepped["b_hn"],
      prepped["w_out"], prepped["b_out"])

    # Normalize outside the kernel: fuses with the un-pad slice, keeps the in-kernel
    # logits writeback tiled/pipelined instead of a full-width VMEM finalize.
    log_probs = logits_pad[:B, :V] - lse[:B]
    return log_probs, h_new_pad[:B, :H][None, :, :]


def _reference_forward(params, tokens, hidden):
    """Pure-JAX reference matching the PyTorch module (eval mode)."""
    x = jnp.maximum(jnp.take(params["embedding"], tokens, axis=0), 0.0)
    h = hidden[0]
    H = h.shape[1]
    gi = x @ params["w_ih"].T + params["b_ih"]
    gh = h @ params["w_hh"].T + params["b_hh"]
    i_r, i_z, i_n = gi[:, :H], gi[:, H:2 * H], gi[:, 2 * H:]
    h_r, h_z, h_n = gh[:, :H], gh[:, H:2 * H], gh[:, 2 * H:]
    r = jax.nn.sigmoid(i_r + h_r)
    z = jax.nn.sigmoid(i_z + h_z)
    n = jnp.tanh(i_n + r * h_n)
    h_new = (1.0 - z) * n + z * h
    logits = h_new @ params["w_out"].T + params["b_out"]
    return jax.nn.log_softmax(logits, axis=1), h_new[None]


if __name__ == "__main__":
    B, H, V = 2, 32, 64
    key = jax.random.PRNGKey(0)
    kp, ki = jax.random.split(key)

    raw = init_params(kp, H, V)
    input_tokens = jax.random.randint(ki, (B,), 0, V, dtype=jnp.int32)
    hidden = jnp.zeros((1, B, H), jnp.float32)   # DecoderRNN.initHidden(batch_size=B)

    # f32 vocab projection: exact PyTorch semantics.
    prepped = prepare_params(raw, H, V)
    log_probs, new_hidden = decoder_rnn_forward(prepped, input_tokens, hidden)
    jax.block_until_ready((log_probs, new_hidden))

    assert log_probs.shape == (B, V)
    assert new_hidden.shape == (1, B, H)
    assert jnp.allclose(jnp.sum(jnp.exp(log_probs), axis=1), 1.0, atol=1e-4)

    ref_logp, ref_h = _reference_forward(raw, input_tokens, hidden)
    assert jnp.allclose(log_probs, ref_logp, atol=1e-4, rtol=1e-4)
    assert jnp.allclose(new_hidden, ref_h, atol=1e-4, rtol=1e-4)

    # bf16 W_out storage (halves the dominant streamed bytes); GRU stays f32.
    prepped_bf16 = prepare_params(raw, H, V, out_proj_dtype=jnp.bfloat16)
    lp16, h16 = decoder_rnn_forward(prepped_bf16, input_tokens, hidden)
    jax.block_until_ready((lp16, h16))
    assert jnp.allclose(jnp.sum(jnp.exp(lp16), axis=1), 1.0, atol=1e-3)
    assert jnp.allclose(h16, ref_h, atol=1e-4, rtol=1e-4)   # hidden state unaffected by bf16 W_out
    assert jnp.allclose(lp16, ref_logp, atol=5e-2)

    print("KERNEL_OK")
</pallas_src>

<mosaic_0001>
module attributes {stable_mosaic.version = 11 : i64} {
  func.func @_decoder_step_kernel(%arg0: i32, %arg1: memref<8xi32, #tpu.memory_space<smem>>, %arg2: memref<64x128xf32, #tpu.memory_space<any>>, %arg3: memref<8x128xf32, #tpu.memory_space<vmem>>, %arg4: memref<128x384xf32, #tpu.memory_space<vmem>>, %arg5: memref<128x384xf32, #tpu.memory_space<vmem>>, %arg6: memref<1x384xf32, #tpu.memory_space<vmem>>, %arg7: memref<1x128xf32, #tpu.memory_space<vmem>>, %arg8: memref<128x128xf32, #tpu.memory_space<vmem>>, %arg9: memref<1x128xf32, #tpu.memory_space<vmem>>, %arg10: memref<8x128xf32, #tpu.memory_space<vmem>>, %arg11: memref<8x1xf32, #tpu.memory_space<vmem>>, %arg12: memref<8x128xf32, #tpu.memory_space<vmem>>, %arg13: memref<8x128xf32, #tpu.memory_space<vmem>>, %arg14: memref<8x128xf32, #tpu.memory_space<vmem>>, %arg15: memref<8x1xf32, #tpu.memory_space<vmem>>, %arg16: memref<8x1xf32, #tpu.memory_space<vmem>>, %arg17: memref<8x!tpu.dma_semaphore, #tpu.memory_space<semaphore_mem>>) attributes {dimension_semantics = [#tpu.dimension_semantics<arbitrary>], iteration_bounds = array<i64: 1>, scalar_prefetch = 1 : i64, scratch_operands = 5 : i64, tpu.core_type = #tpu.core_type<tc>, window_params = [{}, {pipeline_mode = #tpu.pipeline_mode<synchronous>, transform_indices = @transform_1, window_bounds = array<i64: 8, 128>}, {pipeline_mode = #tpu.pipeline_mode<synchronous>, transform_indices = @transform_2, window_bounds = array<i64: 128, 384>}, {pipeline_mode = #tpu.pipeline_mode<synchronous>, transform_indices = @transform_3, window_bounds = array<i64: 128, 384>}, {pipeline_mode = #tpu.pipeline_mode<synchronous>, transform_indices = @transform_4, window_bounds = array<i64: 1, 384>}, {pipeline_mode = #tpu.pipeline_mode<synchronous>, transform_indices = @transform_5, window_bounds = array<i64: 1, 128>}, {transform_indices = @transform_6, window_bounds = array<i64: 128, 128>}, {transform_indices = @transform_7, window_bounds = array<i64: 1, 128>}, {transform_indices = @transform_8, window_bounds = array<i64: 8, 128>}, {pipeline_mode = #tpu.pipeline_mode<synchronous>, transform_indices = @transform_9, window_bounds = array<i64: 8, 1>}, {pipeline_mode = #tpu.pipeline_mode<synchronous>, transform_indices = @transform_10, window_bounds = array<i64: 8, 128>}]} {
    %c0_i32 = arith.constant 0 : i32
    %0 = arith.cmpi eq, %arg0, %c0_i32 : i32
    %1 = arith.extui %0 : i1 to i32
    %c0_i32_0 = arith.constant 0 : i32
    %2 = arith.cmpi ne, %1, %c0_i32_0 : i32
    scf.if %2 {
      %c0_20 = arith.constant 0 : index
      %29 = memref.load %arg1[%c0_20] : memref<8xi32, #tpu.memory_space<smem>>
      %c0_i32_21 = arith.constant 0 : i32
      %c0_i32_22 = arith.constant 0 : i32
      %30 = tpu.memref_slice %arg2[%29, %c0_i32_22] : memref<64x128xf32, #tpu.memory_space<any>> -> memref<1x128xf32, #tpu.memory_space<any>>
      %c0_i32_23 = arith.constant 0 : i32
      %c0_i32_24 = arith.constant 0 : i32
      %31 = tpu.memref_slice %arg13[%c0_i32_23, %c0_i32_24] : memref<8x128xf32, #tpu.memory_space<vmem>> -> memref<1x128xf32, #tpu.memory_space<vmem>>
      %32 = tpu.memref_slice %arg17[%c0_i32_21] : memref<8x!tpu.dma_semaphore, #tpu.memory_space<semaphore_mem>> -> memref<1x!tpu.dma_semaphore, #tpu.memory_space<semaphore_mem>>
      %33 = tpu.memref_squeeze %32 : memref<1x!tpu.dma_semaphore, #tpu.memory_space<semaphore_mem>> -> memref<!tpu.dma_semaphore, #tpu.memory_space<semaphore_mem>>
      tpu.enqueue_dma source(%30 : memref<1x128xf32, #tpu.memory_space<any>>) target(%31 : memref<1x128xf32, #tpu.memory_space<vmem>>) target_semaphore(%33 : memref<!tpu.dma_semaphore, #tpu.memory_space<semaphore_mem>>)
      %c1 = arith.constant 1 : index
      %34 = memref.load %arg1[%c1] : memref<8xi32, #tpu.memory_space<smem>>
      %c1_i32 = arith.constant 1 : i32
      %c0_i32_25 = arith.constant 0 : i32
      %35 = tpu.memref_slice %arg2[%34, %c0_i32_25] : memref<64x128xf32, #tpu.memory_space<any>> -> memref<1x128xf32, #tpu.memory_space<any>>
      %c1_i32_26 = arith.constant 1 : i32
      %c0_i32_27 = arith.constant 0 : i32
      %36 = tpu.memref_slice %arg13[%c1_i32_26, %c0_i32_27] : memref<8x128xf32, #tpu.memory_space<vmem>> -> memref<1x128xf32, #tpu.memory_space<vmem>>
      %37 = tpu.memref_slice %arg17[%c1_i32] : memref<8x!tpu.dma_semaphore, #tpu.memory_space<semaphore_mem>> -> memref<1x!tpu.dma_semaphore, #tpu.memory_space<semaphore_mem>>
      %38 = tpu.memref_squeeze %37 : memref<1x!tpu.dma_semaphore, #tpu.memory_space<semaphore_mem>> -> memref<!tpu.dma_semaphore, #tpu.memory_space<semaphore_mem>>
      tpu.enqueue_dma source(%35 : memref<1x128xf32, #tpu.memory_space<any>>) target(%36 : memref<1x128xf32, #tpu.memory_space<vmem>>) target_semaphore(%38 : memref<!tpu.dma_semaphore, #tpu.memory_space<semaphore_mem>>)
      %c2 = arith.constant 2 : index
      %39 = memref.load %arg1[%c2] : memref<8xi32, #tpu.memory_space<smem>>
      %c2_i32 = arith.constant 2 : i32
      %c0_i32_28 = arith.constant 0 : i32
      %40 = tpu.memref_slice %arg2[%39, %c0_i32_28] : memref<64x128xf32, #tpu.memory_space<any>> -> memref<1x128xf32, #tpu.memory_space<any>>
      %c2_i32_29 = arith.constant 2 : i32
      %c0_i32_30 = arith.constant 0 : i32
      %41 = tpu.memref_slice %arg13[%c2_i32_29, %c0_i32_30] : memref<8x128xf32, #tpu.memory_space<vmem>> -> memref<1x128xf32, #tpu.memory_space<vmem>>
      %42 = tpu.memref_slice %arg17[%c2_i32] : memref<8x!tpu.dma_semaphore, #tpu.memory_space<semaphore_mem>> -> memref<1x!tpu.dma_semaphore, #tpu.memory_space<semaphore_mem>>
      %43 = tpu.memref_squeeze %42 : memref<1x!tpu.dma_semaphore, #tpu.memory_space<semaphore_mem>> -> memref<!tpu.dma_semaphore, #tpu.memory_space<semaphore_mem>>
      tpu.enqueue_dma source(%40 : memref<1x128xf32, #tpu.memory_space<any>>) target(%41 : memref<1x128xf32, #tpu.memory_space<vmem>>) target_semaphore(%43 : memref<!tpu.dma_semaphore, #tpu.memory_space<semaphore_mem>>)
      %c3 = arith.constant 3 : index
      %44 = memref.load %arg1[%c3] : memref<8xi32, #tpu.memory_space<smem>>
      %c3_i32 = arith.constant 3 : i32
      %c0_i32_31 = arith.constant 0 : i32
      %45 = tpu.memref_slice %arg2[%44, %c0_i32_31] : memref<64x128xf32, #tpu.memory_space<any>> -> memref<1x128xf32, #tpu.memory_space<any>>
      %c3_i32_32 = arith.constant 3 : i32
      %c0_i32_33 = arith.constant 0 : i32
      %46 = tpu.memref_slice %arg13[%c3_i32_32, %c0_i32_33] : memref<8x128xf32, #tpu.memory_space<vmem>> -> memref<1x128xf32, #tpu.memory_space<vmem>>
      %47 = tpu.memref_slice %arg17[%c3_i32] : memref<8x!tpu.dma_semaphore, #tpu.memory_space<semaphore_mem>> -> memref<1x!tpu.dma_semaphore, #tpu.memory_space<semaphore_mem>>
      %48 = tpu.memref_squeeze %47 : memref<1x!tpu.dma_semaphore, #tpu.memory_space<semaphore_mem>> -> memref<!tpu.dma_semaphore, #tpu.memory_space<semaphore_mem>>
      tpu.enqueue_dma source(%45 : memref<1x128xf32, #tpu.memory_space<any>>) target(%46 : memref<1x128xf32, #tpu.memory_space<vmem>>) target_semaphore(%48 : memref<!tpu.dma_semaphore, #tpu.memory_space<semaphore_mem>>)
      %c4 = arith.constant 4 : index
      %49 = memref.load %arg1[%c4] : memref<8xi32, #tpu.memory_space<smem>>
      %c4_i32 = arith.constant 4 : i32
      %c0_i32_34 = arith.constant 0 : i32
      %50 = tpu.memref_slice %arg2[%49, %c0_i32_34] : memref<64x128xf32, #tpu.memory_space<any>> -> memref<1x128xf32, #tpu.memory_space<any>>
      %c4_i32_35 = arith.constant 4 : i32
      %c0_i32_36 = arith.constant 0 : i32
      %51 = tpu.memref_slice %arg13[%c4_i32_35, %c0_i32_36] : memref<8x128xf32, #tpu.memory_space<vmem>> -> memref<1x128xf32, #tpu.memory_space<vmem>>
      %52 = tpu.memref_slice %arg17[%c4_i32] : memref<8x!tpu.dma_semaphore, #tpu.memory_space<semaphore_mem>> -> memref<1x!tpu.dma_semaphore, #tpu.memory_space<semaphore_mem>>
      %53 = tpu.memref_squeeze %52 : memref<1x!tpu.dma_semaphore, #tpu.memory_space<semaphore_mem>> -> memref<!tpu.dma_semaphore, #tpu.memory_space<semaphore_mem>>
      tpu.enqueue_dma source(%50 : memref<1x128xf32, #tpu.memory_space<any>>) target(%51 : memref<1x128xf32, #tpu.memory_space<vmem>>) target_semaphore(%53 : memref<!tpu.dma_semaphore, #tpu.memory_space<semaphore_mem>>)
      %c5 = arith.constant 5 : index
      %54 = memref.load %arg1[%c5] : memref<8xi32, #tpu.memory_space<smem>>
      %c5_i32 = arith.constant 5 : i32
      %c0_i32_37 = arith.constant 0 : i32
      %55 = tpu.memref_slice %arg2[%54, %c0_i32_37] : memref<64x128xf32, #tpu.memory_space<any>> -> memref<1x128xf32, #tpu.memory_space<any>>
      %c5_i32_38 = arith.constant 5 : i32
      %c0_i32_39 = arith.constant 0 : i32
      %56 = tpu.memref_slice %arg13[%c5_i32_38, %c0_i32_39] : memref<8x128xf32, #tpu.memory_space<vmem>> -> memref<1x128xf32, #tpu.memory_space<vmem>>
      %57 = tpu.memref_slice %arg17[%c5_i32] : memref<8x!tpu.dma_semaphore, #tpu.memory_space<semaphore_mem>> -> memref<1x!tpu.dma_semaphore, #tpu.memory_space<semaphore_mem>>
      %58 = tpu.memref_squeeze %57 : memref<1x!tpu.dma_semaphore, #tpu.memory_space<semaphore_mem>> -> memref<!tpu.dma_semaphore, #tpu.memory_space<semaphore_mem>>
      tpu.enqueue_dma source(%55 : memref<1x128xf32, #tpu.memory_space<any>>) target(%56 : memref<1x128xf32, #tpu.memory_space<vmem>>) target_semaphore(%58 : memref<!tpu.dma_semaphore, #tpu.memory_space<semaphore_mem>>)
      %c6 = arith.constant 6 : index
      %59 = memref.load %arg1[%c6] : memref<8xi32, #tpu.memory_space<smem>>
      %c6_i32 = arith.constant 6 : i32
      %c0_i32_40 = arith.constant 0 : i32
      %60 = tpu.memref_slice %arg2[%59, %c0_i32_40] : memref<64x128xf32, #tpu.memory_space<any>> -> memref<1x128xf32, #tpu.memory_space<any>>
      %c6_i32_41 = arith.constant 6 : i32
      %c0_i32_42 = arith.constant 0 : i32
      %61 = tpu.memref_slice %arg13[%c6_i32_41, %c0_i32_42] : memref<8x128xf32, #tpu.memory_space<vmem>> -> memref<1x128xf32, #tpu.memory_space<vmem>>
      %62 = tpu.memref_slice %arg17[%c6_i32] : memref<8x!tpu.dma_semaphore, #tpu.memory_space<semaphore_mem>> -> memref<1x!tpu.dma_semaphore, #tpu.memory_space<semaphore_mem>>
      %63 = tpu.memref_squeeze %62 : memref<1x!tpu.dma_semaphore, #tpu.memory_space<semaphore_mem>> -> memref<!tpu.dma_semaphore, #tpu.memory_space<semaphore_mem>>
      tpu.enqueue_dma source(%60 : memref<1x128xf32, #tpu.memory_space<any>>) target(%61 : memref<1x128xf32, #tpu.memory_space<vmem>>) target_semaphore(%63 : memref<!tpu.dma_semaphore, #tpu.memory_space<semaphore_mem>>)
      %c7 = arith.constant 7 : index
      %64 = memref.load %arg1[%c7] : memref<8xi32, #tpu.memory_space<smem>>
      %c7_i32 = arith.constant 7 : i32
      %c0_i32_43 = arith.constant 0 : i32
      %65 = tpu.memref_slice %arg2[%64, %c0_i32_43] : memref<64x128xf32, #tpu.memory_space<any>> -> memref<1x128xf32, #tpu.memory_space<any>>
      %c7_i32_44 = arith.constant 7 : i32
      %c0_i32_45 = arith.constant 0 : i32
      %66 = tpu.memref_slice %arg13[%c7_i32_44, %c0_i32_45] : memref<8x128xf32, #tpu.memory_space<vmem>> -> memref<1x128xf32, #tpu.memory_space<vmem>>
      %67 = tpu.memref_slice %arg17[%c7_i32] : memref<8x!tpu.dma_semaphore, #tpu.memory_space<semaphore_mem>> -> memref<1x!tpu.dma_semaphore, #tpu.memory_space<semaphore_mem>>
      %68 = tpu.memref_squeeze %67 : memref<1x!tpu.dma_semaphore, #tpu.memory_space<semaphore_mem>> -> memref<!tpu.dma_semaphore, #tpu.memory_space<semaphore_mem>>
      tpu.enqueue_dma source(%65 : memref<1x128xf32, #tpu.memory_space<any>>) target(%66 : memref<1x128xf32, #tpu.memory_space<vmem>>) target_semaphore(%68 : memref<!tpu.dma_semaphore, #tpu.memory_space<semaphore_mem>>)
      %c0_i32_46 = arith.constant 0 : i32
      %c0_i32_47 = arith.constant 0 : i32
      %69 = tpu.memref_slice %arg2[%29, %c0_i32_47] : memref<64x128xf32, #tpu.memory_space<any>> -> memref<1x128xf32, #tpu.memory_space<any>>
      %c0_i32_48 = arith.constant 0 : i32
      %c0_i32_49 = arith.constant 0 : i32
      %70 = tpu.memref_slice %arg13[%c0_i32_48, %c0_i32_49] : memref<8x128xf32, #tpu.memory_space<vmem>> -> memref<1x128xf32, #tpu.memory_space<vmem>>
      %71 = tpu.memref_slice %arg17[%c0_i32_46] : memref<8x!tpu.dma_semaphore, #tpu.memory_space<semaphore_mem>> -> memref<1x!tpu.dma_semaphore, #tpu.memory_space<semaphore_mem>>
      %72 = tpu.memref_squeeze %71 : memref<1x!tpu.dma_semaphore, #tpu.memory_space<semaphore_mem>> -> memref<!tpu.dma_semaphore, #tpu.memory_space<semaphore_mem>>
      tpu.wait_dma2 semaphore(%72 : memref<!tpu.dma_semaphore, #tpu.memory_space<semaphore_mem>>) src(%69 : memref<1x128xf32, #tpu.memory_space<any>>) dst(%70 : memref<1x128xf32, #tpu.memory_space<vmem>>)
      %c1_i32_50 = arith.constant 1 : i32
      %c0_i32_51 = arith.constant 0 : i32
      %73 = tpu.memref_slice %arg2[%34, %c0_i32_51] : memref<64x128xf32, #tpu.memory_space<any>> -> memref<1x128xf32, #tpu.memory_space<any>>
      %c1_i32_52 = arith.constant 1 : i32
      %c0_i32_53 = arith.constant 0 : i32
      %74 = tpu.memref_slice %arg13[%c1_i32_52, %c0_i32_53] : memref<8x128xf32, #tpu.memory_space<vmem>> -> memref<1x128xf32, #tpu.memory_space<vmem>>
      %75 = tpu.memref_slice %arg17[%c1_i32_50] : memref<8x!tpu.dma_semaphore, #tpu.memory_space<semaphore_mem>> -> memref<1x!tpu.dma_semaphore, #tpu.memory_space<semaphore_mem>>
      %76 = tpu.memref_squeeze %75 : memref<1x!tpu.dma_semaphore, #tpu.memory_space<semaphore_mem>> -> memref<!tpu.dma_semaphore, #tpu.memory_space<semaphore_mem>>
      tpu.wait_dma2 semaphore(%76 : memref<!tpu.dma_semaphore, #tpu.memory_space<semaphore_mem>>) src(%73 : memref<1x128xf32, #tpu.memory_space<any>>) dst(%74 : memref<1x128xf32, #tpu.memory_space<vmem>>)
      %c2_i32_54 = arith.constant 2 : i32
      %c0_i32_55 = arith.constant 0 : i32
      %77 = tpu.memref_slice %arg2[%39, %c0_i32_55] : memref<64x128xf32, #tpu.memory_space<any>> -> memref<1x128xf32, #tpu.memory_space<any>>
      %c2_i32_56 = arith.constant 2 : i32
      %c0_i32_57 = arith.constant 0 : i32
      %78 = tpu.memref_slice %arg13[%c2_i32_56, %c0_i32_57] : memref<8x128xf32, #tpu.memory_space<vmem>> -> memref<1x128xf32, #tpu.memory_space<vmem>>
      %79 = tpu.memref_slice %arg17[%c2_i32_54] : memref<8x!tpu.dma_semaphore, #tpu.memory_space<semaphore_mem>> -> memref<1x!tpu.dma_semaphore, #tpu.memory_space<semaphore_mem>>
      %80 = tpu.memref_squeeze %79 : memref<1x!tpu.dma_semaphore, #tpu.memory_space<semaphore_mem>> -> memref<!tpu.dma_semaphore, #tpu.memory_space<semaphore_mem>>
      tpu.wait_dma2 semaphore(%80 : memref<!tpu.dma_semaphore, #tpu.memory_space<semaphore_mem>>) src(%77 : memref<1x128xf32, #tpu.memory_space<any>>) dst(%78 : memref<1x128xf32, #tpu.memory_space<vmem>>)
      %c3_i32_58 = arith.constant 3 : i32
      %c0_i32_59 = arith.constant 0 : i32
      %81 = tpu.memref_slice %arg2[%44, %c0_i32_59] : memref<64x128xf32, #tpu.memory_space<any>> -> memref<1x128xf32, #tpu.memory_space<any>>
      %c3_i32_60 = arith.constant 3 : i32
      %c0_i32_61 = arith.constant 0 : i32
      %82 = tpu.memref_slice %arg13[%c3_i32_60, %c0_i32_61] : memref<8x128xf32, #tpu.memory_space<vmem>> -> memref<1x128xf32, #tpu.memory_space<vmem>>
      %83 = tpu.memref_slice %arg17[%c3_i32_58] : memref<8x!tpu.dma_semaphore, #tpu.memory_space<semaphore_mem>> -> memref<1x!tpu.dma_semaphore, #tpu.memory_space<semaphore_mem>>
      %84 = tpu.memref_squeeze %83 : memref<1x!tpu.dma_semaphore, #tpu.memory_space<semaphore_mem>> -> memref<!tpu.dma_semaphore, #tpu.memory_space<semaphore_mem>>
      tpu.wait_dma2 semaphore(%84 : memref<!tpu.dma_semaphore, #tpu.memory_space<semaphore_mem>>) src(%81 : memref<1x128xf32, #tpu.memory_space<any>>) dst(%82 : memref<1x128xf32, #tpu.memory_space<vmem>>)
      %c4_i32_62 = arith.constant 4 : i32
      %c0_i32_63 = arith.constant 0 : i32
      %85 = tpu.memref_slice %arg2[%49, %c0_i32_63] : memref<64x128xf32, #tpu.memory_space<any>> -> memref<1x128xf32, #tpu.memory_space<any>>
      %c4_i32_64 = arith.constant 4 : i32
      %c0_i32_65 = arith.constant 0 : i32
      %86 = tpu.memref_slice %arg13[%c4_i32_64, %c0_i32_65] : memref<8x128xf32, #tpu.memory_space<vmem>> -> memref<1x128xf32, #tpu.memory_space<vmem>>
      %87 = tpu.memref_slice %arg17[%c4_i32_62] : memref<8x!tpu.dma_semaphore, #tpu.memory_space<semaphore_mem>> -> memref<1x!tpu.dma_semaphore, #tpu.memory_space<semaphore_mem>>
      %88 = tpu.memref_squeeze %87 : memref<1x!tpu.dma_semaphore, #tpu.memory_space<semaphore_mem>> -> memref<!tpu.dma_semaphore, #tpu.memory_space<semaphore_mem>>
      tpu.wait_dma2 semaphore(%88 : memref<!tpu.dma_semaphore, #tpu.memory_space<semaphore_mem>>) src(%85 : memref<1x128xf32, #tpu.memory_space<any>>) dst(%86 : memref<1x128xf32, #tpu.memory_space<vmem>>)
      %c5_i32_66 = arith.constant 5 : i32
      %c0_i32_67 = arith.constant 0 : i32
      %89 = tpu.memref_slice %arg2[%54, %c0_i32_67] : memref<64x128xf32, #tpu.memory_space<any>> -> memref<1x128xf32, #tpu.memory_space<any>>
      %c5_i32_68 = arith.constant 5 : i32
      %c0_i32_69 = arith.constant 0 : i32
      %90 = tpu.memref_slice %arg13[%c5_i32_68, %c0_i32_69] : memref<8x128xf32, #tpu.memory_space<vmem>> -> memref<1x128xf32, #tpu.memory_space<vmem>>
      %91 = tpu.memref_slice %arg17[%c5_i32_66] : memref<8x!tpu.dma_semaphore, #tpu.memory_space<semaphore_mem>> -> memref<1x!tpu.dma_semaphore, #tpu.memory_space<semaphore_mem>>
      %92 = tpu.memref_squeeze %91 : memref<1x!tpu.dma_semaphore, #tpu.memory_space<semaphore_mem>> -> memref<!tpu.dma_semaphore, #tpu.memory_space<semaphore_mem>>
      tpu.wait_dma2 semaphore(%92 : memref<!tpu.dma_semaphore, #tpu.memory_space<semaphore_mem>>) src(%89 : memref<1x128xf32, #tpu.memory_space<any>>) dst(%90 : memref<1x128xf32, #tpu.memory_space<vmem>>)
      %c6_i32_70 = arith.constant 6 : i32
      %c0_i32_71 = arith.constant 0 : i32
      %93 = tpu.memref_slice %arg2[%59, %c0_i32_71] : memref<64x128xf32, #tpu.memory_space<any>> -> memref<1x128xf32, #tpu.memory_space<any>>
      %c6_i32_72 = arith.constant 6 : i32
      %c0_i32_73 = arith.constant 0 : i32
      %94 = tpu.memref_slice %arg13[%c6_i32_72, %c0_i32_73] : memref<8x128xf32, #tpu.memory_space<vmem>> -> memref<1x128xf32, #tpu.memory_space<vmem>>
      %95 = tpu.memref_slice %arg17[%c6_i32_70] : memref<8x!tpu.dma_semaphore, #tpu.memory_space<semaphore_mem>> -> memref<1x!tpu.dma_semaphore, #tpu.memory_space<semaphore_mem>>
      %96 = tpu.memref_squeeze %95 : memref<1x!tpu.dma_semaphore, #tpu.memory_space<semaphore_mem>> -> memref<!tpu.dma_semaphore, #tpu.memory_space<semaphore_mem>>
      tpu.wait_dma2 semaphore(%96 : memref<!tpu.dma_semaphore, #tpu.memory_space<semaphore_mem>>) src(%93 : memref<1x128xf32, #tpu.memory_space<any>>) dst(%94 : memref<1x128xf32, #tpu.memory_space<vmem>>)
      %c7_i32_74 = arith.constant 7 : i32
      %c0_i32_75 = arith.constant 0 : i32
      %97 = tpu.memref_slice %arg2[%64, %c0_i32_75] : memref<64x128xf32, #tpu.memory_space<any>> -> memref<1x128xf32, #tpu.memory_space<any>>
      %c7_i32_76 = arith.constant 7 : i32
      %c0_i32_77 = arith.constant 0 : i32
      %98 = tpu.memref_slice %arg13[%c7_i32_76, %c0_i32_77] : memref<8x128xf32, #tpu.memory_space<vmem>> -> memref<1x128xf32, #tpu.memory_space<vmem>>
      %99 = tpu.memref_slice %arg17[%c7_i32_74] : memref<8x!tpu.dma_semaphore, #tpu.memory_space<semaphore_mem>> -> memref<1x!tpu.dma_semaphore, #tpu.memory_space<semaphore_mem>>
      %100 = tpu.memref_squeeze %99 : memref<1x!tpu.dma_semaphore, #tpu.memory_space<semaphore_mem>> -> memref<!tpu.dma_semaphore, #tpu.memory_space<semaphore_mem>>
      tpu.wait_dma2 semaphore(%100 : memref<!tpu.dma_semaphore, #tpu.memory_space<semaphore_mem>>) src(%97 : memref<1x128xf32, #tpu.memory_space<any>>) dst(%98 : memref<1x128xf32, #tpu.memory_space<vmem>>)
      %c0_78 = arith.constant 0 : index
      %c0_79 = arith.constant 0 : index
      %101 = vector.load %arg13[%c0_78, %c0_79] : memref<8x128xf32, #tpu.memory_space<vmem>>, vector<8x128xf32>
      %cst_80 = arith.constant 0.000000e+00 : f32
      %102 = vector.broadcast %cst_80 : f32 to vector<8x128xf32>
      %103 = arith.maximumf %101, %102 : vector<8x128xf32>
      %c0_81 = arith.constant 0 : index
      %c0_82 = arith.constant 0 : index
      %104 = vector.load %arg3[%c0_81, %c0_82] : memref<8x128xf32, #tpu.memory_space<vmem>>, vector<8x128xf32>
      %c0_83 = arith.constant 0 : index
      %c0_84 = arith.constant 0 : index
      %105 = vector.load %arg4[%c0_83, %c0_84] : memref<128x384xf32, #tpu.memory_space<vmem>>, vector<128x384xf32>
      %cst_85 = arith.constant dense<0.000000e+00> : vector<8x384xf32>
      %106 = tpu.matmul %103, %105, %cst_85 {dimension_numbers = #tpu.dot_dimension_numbers<[1], [0], [0], [1], [0, 0, 1, 1], [], []>} : vector<8x128xf32>, vector<128x384xf32>, vector<8x384xf32> -> vector<8x384xf32>
      %c0_86 = arith.constant 0 : index
      %c0_87 = arith.constant 0 : index
      %107 = vector.load %arg6[%c0_86, %c0_87] : memref<1x384xf32, #tpu.memory_space<vmem>>, vector<1x384xf32>
      %108 = vector.broadcast %107 : vector<1x384xf32> to vector<8x384xf32>
      %109 = arith.addf %106, %108 : vector<8x384xf32>
      %c0_88 = arith.constant 0 : index
      %c0_89 = arith.constant 0 : index
      %110 = vector.load %arg5[%c0_88, %c0_89] : memref<128x384xf32, #tpu.memory_space<vmem>>, vector<128x384xf32>
      %cst_90 = arith.constant dense<0.000000e+00> : vector<8x384xf32>
      %111 = tpu.matmul %104, %110, %cst_90 {dimension_numbers = #tpu.dot_dimension_numbers<[1], [0], [0], [1], [0, 0, 1, 1], [], []>} : vector<8x128xf32>, vector<128x384xf32>, vector<8x384xf32> -> vector<8x384xf32>
      %112 = vector.extract_strided_slice %109 {offsets = [0, 0], sizes = [8, 128], strides = [1, 1]} : vector<8x384xf32> to vector<8x128xf32>
      %113 = vector.extract_strided_slice %109 {offsets = [0, 128], sizes = [8, 128], strides = [1, 1]} : vector<8x384xf32> to vector<8x128xf32>
      %114 = vector.extract_strided_slice %109 {offsets = [0, 256], sizes = [8, 128], strides = [1, 1]} : vector<8x384xf32> to vector<8x128xf32>
      %115 = vector.extract_strided_slice %111 {offsets = [0, 0], sizes = [8, 128], strides = [1, 1]} : vector<8x384xf32> to vector<8x128xf32>
      %116 = vector.extract_strided_slice %111 {offsets = [0, 128], sizes = [8, 128], strides = [1, 1]} : vector<8x384xf32> to vector<8x128xf32>
      %117 = vector.extract_strided_slice %111 {offsets = [0, 256], sizes = [8, 128], strides = [1, 1]} : vector<8x384xf32> to vector<8x128xf32>
      %118 = arith.addf %112, %115 : vector<8x128xf32>
      %119 = arith.negf %118 : vector<8x128xf32>
      %120 = math.exp %119 : vector<8x128xf32>
      %cst_91 = arith.constant 1.000000e+00 : f32
      %121 = vector.broadcast %cst_91 : f32 to vector<8x128xf32>
      %122 = arith.addf %121, %120 : vector<8x128xf32>
      %123 = arith.divf %121, %122 : vector<8x128xf32>
      %124 = arith.addf %113, %116 : vector<8x128xf32>
      %125 = arith.negf %124 : vector<8x128xf32>
      %126 = math.exp %125 : vector<8x128xf32>
      %cst_92 = arith.constant 1.000000e+00 : f32
      %127 = vector.broadcast %cst_92 : f32 to vector<8x128xf32>
      %128 = arith.addf %127, %126 : vector<8x128xf32>
      %129 = arith.divf %127, %128 : vector<8x128xf32>
      %c0_93 = arith.constant 0 : index
      %c0_94 = arith.constant 0 : index
      %130 = vector.load %arg7[%c0_93, %c0_94] : memref<1x128xf32, #tpu.memory_space<vmem>>, vector<1x128xf32>
      %131 = vector.broadcast %130 : vector<1x128xf32> to vector<8x128xf32>
      %132 = arith.addf %117, %131 : vector<8x128xf32>
      %133 = arith.mulf %123, %132 : vector<8x128xf32>
      %134 = arith.addf %114, %133 : vector<8x128xf32>
      %135 = math.tanh %134 : vector<8x128xf32>
      %cst_95 = arith.constant 1.000000e+00 : f32
      %136 = vector.broadcast %cst_95 : f32 to vector<8x128xf32>
      %137 = arith.subf %136, %129 : vector<8x128xf32>
      %138 = arith.mulf %137, %135 : vector<8x128xf32>
      %139 = arith.mulf %129, %104 : vector<8x128xf32>
      %140 = arith.addf %138, %139 : vector<8x128xf32>
      %c0_96 = arith.constant 0 : index
      %c0_97 = arith.constant 0 : index
      %141 = vector.load %arg12[%c0_96, %c0_97] : memref<8x128xf32, #tpu.memory_space<vmem>>, vector<8x128xf32>
      tpu.vector_store %arg12[%c0_96, %c0_97], %140 {strides = array<i32>} : memref<8x128xf32, #tpu.memory_space<vmem>>, vector<8x128xf32>,
      %c0_98 = arith.constant 0 : index
      %c0_99 = arith.constant 0 : index
      %142 = vector.load %arg14[%c0_98, %c0_99] : memref<8x128xf32, #tpu.memory_space<vmem>>, vector<8x128xf32>
      tpu.vector_store %arg14[%c0_98, %c0_99], %140 {strides = array<i32>} : memref<8x128xf32, #tpu.memory_space<vmem>>, vector<8x128xf32>,
      %cst_100 = arith.constant -1.000000e+30 : f32
      %143 = vector.broadcast %cst_100 : f32 to vector<8x1xf32>
      %c0_101 = arith.constant 0 : index
      %c0_102 = arith.constant 0 : index
      %144 = vector.load %arg15[%c0_101, %c0_102] : memref<8x1xf32, #tpu.memory_space<vmem>>, vector<8x1xf32>
      tpu.vector_store %arg15[%c0_101, %c0_102], %143 {strides = array<i32>} : memref<8x1xf32, #tpu.memory_space<vmem>>, vector<8x1xf32>,
      %cst_103 = arith.constant 0.000000e+00 : f32
      %145 = vector.broadcast %cst_103 : f32 to vector<8x1xf32>
      %c0_104 = arith.constant 0 : index
      %c0_105 = arith.constant 0 : index
      %146 = vector.load %arg16[%c0_104, %c0_105] : memref<8x1xf32, #tpu.memory_space<vmem>>, vector<8x1xf32>
      tpu.vector_store %arg16[%c0_104, %c0_105], %145 {strides = array<i32>} : memref<8x1xf32, #tpu.memory_space<vmem>>, vector<8x1xf32>,
    } else {
    }
    %c0 = arith.constant 0 : index
    %c0_1 = arith.constant 0 : index
    %3 = vector.load %arg14[%c0, %c0_1] : memref<8x128xf32, #tpu.memory_space<vmem>>, vector<8x128xf32>
    %c0_2 = arith.constant 0 : index
    %c0_3 = arith.constant 0 : index
    %4 = vector.load %arg8[%c0_2, %c0_3] : memref<128x128xf32, #tpu.memory_space<vmem>>, vector<128x128xf32>
    %cst = arith.constant dense<0.000000e+00> : vector<8x128xf32>
    %5 = tpu.matmul %3, %4, %cst {dimension_numbers = #tpu.dot_dimension_numbers<[1], [0], [0], [1], [0, 0, 1, 1], [], []>} : vector<8x128xf32>, vector<128x128xf32>, vector<8x128xf32> -> vector<8x128xf32>
    %c0_4 = arith.constant 0 : index
    %c0_5 = arith.constant 0 : index
    %6 = vector.load %arg9[%c0_4, %c0_5] : memref<1x128xf32, #tpu.memory_space<vmem>>, vector<1x128xf32>
    %7 = vector.broadcast %6 : vector<1x128xf32> to vector<8x128xf32>
    %8 = arith.addf %5, %7 : vector<8x128xf32>
    %c0_6 = arith.constant 0 : index
    %c0_7 = arith.constant 0 : index
    %9 = vector.load %arg10[%c0_6, %c0_7] : memref<8x128xf32, #tpu.memory_space<vmem>>, vector<8x128xf32>
    tpu.vector_store %arg10[%c0_6, %c0_7], %8 {strides = array<i32>} : memref<8x128xf32, #tpu.memory_space<vmem>>, vector<8x128xf32>,
    %c0_8 = arith.constant 0 : index
    %c0_9 = arith.constant 0 : index
    %10 = vector.load %arg15[%c0_8, %c0_9] : memref<8x1xf32, #tpu.memory_space<vmem>>, vector<8x1xf32>
    %cst_10 = arith.constant dense<0xFF800000> : vector<8xf32>
    %11 = vector.multi_reduction <maximumf>, %8, %cst_10 [1] : vector<8x128xf32> to vector<8xf32>
    %12 = vector.shape_cast %11 : vector<8xf32> to vector<8x1xf32>
    %13 = arith.maximumf %10, %12 : vector<8x1xf32>
    %c0_11 = arith.constant 0 : index
    %c0_12 = arith.constant 0 : index
    %14 = vector.load %arg16[%c0_11, %c0_12] : memref<8x1xf32, #tpu.memory_space<vmem>>, vector<8x1xf32>
    %15 = arith.subf %10, %13 : vector<8x1xf32>
    %16 = math.exp %15 : vector<8x1xf32>
    %17 = arith.mulf %14, %16 : vector<8x1xf32>
    %18 = vector.broadcast %13 : vector<8x1xf32> to vector<8x128xf32>
    %19 = arith.subf %8, %18 : vector<8x128xf32>
    %20 = math.exp %19 : vector<8x128xf32>
    %cst_13 = arith.constant dense<0.000000e+00> : vector<8xf32>
    %21 = vector.multi_reduction <add>, %20, %cst_13 [1] : vector<8x128xf32> to vector<8xf32>
    %22 = vector.shape_cast %21 : vector<8xf32> to vector<8x1xf32>
    %23 = arith.addf %17, %22 : vector<8x1xf32>
    %c0_14 = arith.constant 0 : index
    %c0_15 = arith.constant 0 : index
    %24 = vector.load %arg16[%c0_14, %c0_15] : memref<8x1xf32, #tpu.memory_space<vmem>>, vector<8x1xf32>
    tpu.vector_store %arg16[%c0_14, %c0_15], %23 {strides = array<i32>} : memref<8x1xf32, #tpu.memory_space<vmem>>, vector<8x1xf32>,
    %c0_16 = arith.constant 0 : index
    %c0_17 = arith.constant 0 : index
    %25 = vector.load %arg15[%c0_16, %c0_17] : memref<8x1xf32, #tpu.memory_space<vmem>>, vector<8x1xf32>
    tpu.vector_store %arg15[%c0_16, %c0_17], %13 {strides = array<i32>} : memref<8x1xf32, #tpu.memory_space<vmem>>, vector<8x1xf32>,
    %c0_i32_18 = arith.constant 0 : i32
    %26 = arith.cmpi eq, %arg0, %c0_i32_18 : i32
    %27 = arith.extui %26 : i1 to i32
    %c0_i32_19 = arith.constant 0 : i32
    %28 = arith.cmpi ne, %27, %c0_i32_19 : i32
    scf.if %28 {
      %c0_20 = arith.constant 0 : index
      %c0_21 = arith.constant 0 : index
      %29 = vector.load %arg15[%c0_20, %c0_21] : memref<8x1xf32, #tpu.memory_space<vmem>>, vector<8x1xf32>
      %c0_22 = arith.constant 0 : index
      %c0_23 = arith.constant 0 : index
      %30 = vector.load %arg16[%c0_22, %c0_23] : memref<8x1xf32, #tpu.memory_space<vmem>>, vector<8x1xf32>
      %31 = math.log %30 : vector<8x1xf32>
      %32 = arith.addf %29, %31 : vector<8x1xf32>
      %c0_24 = arith.constant 0 : index
      %c0_25 = arith.constant 0 : index
      %33 = vector.load %arg11[%c0_24, %c0_25] : memref<8x1xf32, #tpu.memory_space<vmem>>, vector<8x1xf32>
      tpu.vector_store %arg11[%c0_24, %c0_25], %32 {strides = array<i32>} : memref<8x1xf32, #tpu.memory_space<vmem>>, vector<8x1xf32>,
    } else {
    }
    return
  }
  func.func @transform_1(%arg0: i32, %arg1: memref<8xi32, #tpu.memory_space<smem>>) -> (i32, i32) {
    %c0_i32 = arith.constant 0 : i32
    %c0_i32_0 = arith.constant 0 : i32
    %c0_i32_1 = arith.constant 0 : i32
    return %c0_i32, %c0_i32_0 : i32, i32
  }
  func.func @transform_2(%arg0: i32, %arg1: memref<8xi32, #tpu.memory_space<smem>>) -> (i32, i32) {
    %c0_i32 = arith.constant 0 : i32
    %c0_i32_0 = arith.constant 0 : i32
    %c0_i32_1 = arith.constant 0 : i32
    return %c0_i32, %c0_i32_0 : i32, i32
  }
  func.func @transform_3(%arg0: i32, %arg1: memref<8xi32, #tpu.memory_space<smem>>) -> (i32, i32) {
    %c0_i32 = arith.constant 0 : i32
    %c0_i32_0 = arith.constant 0 : i32
    %c0_i32_1 = arith.constant 0 : i32
    return %c0_i32, %c0_i32_0 : i32, i32
  }
  func.func @transform_4(%arg0: i32, %arg1: memref<8xi32, #tpu.memory_space<smem>>) -> (i32, i32) {
    %c0_i32 = arith.constant 0 : i32
    %c0_i32_0 = arith.constant 0 : i32
    %c0_i32_1 = arith.constant 0 : i32
    return %c0_i32, %c0_i32_0 : i32, i32
  }
  func.func @transform_5(%arg0: i32, %arg1: memref<8xi32, #tpu.memory_space<smem>>) -> (i32, i32) {
    %c0_i32 = arith.constant 0 : i32
    %c0_i32_0 = arith.constant 0 : i32
    %c0_i32_1 = arith.constant 0 : i32
    return %c0_i32, %c0_i32_0 : i32, i32
  }
  func.func @transform_6(%arg0: i32, %arg1: memref<8xi32, #tpu.memory_space<smem>>) -> (i32, i32) {
    %c0_i32 = arith.constant 0 : i32
    %c0_i32_0 = arith.constant 0 : i32
    return %c0_i32, %arg0 : i32, i32
  }
  func.func @transform_7(%arg0: i32, %arg1: memref<8xi32, #tpu.memory_space<smem>>) -> (i32, i32) {
    %c0_i32 = arith.constant 0 : i32
    %c0_i32_0 = arith.constant 0 : i32
    return %c0_i32, %arg0 : i32, i32
  }
  func.func @transform_8(%arg0: i32, %arg1: memref<8xi32, #tpu.memory_space<smem>>) -> (i32, i32) {
    %c0_i32 = arith.constant 0 : i32
    %c0_i32_0 = arith.constant 0 : i32
    return %c0_i32, %arg0 : i32, i32
  }
  func.func @transform_9(%arg0: i32, %arg1: memref<8xi32, #tpu.memory_space<smem>>) -> (i32, i32) {
    %c0_i32 = arith.constant 0 : i32
    %c0_i32_0 = arith.constant 0 : i32
    %c0_i32_1 = arith.constant 0 : i32
    return %c0_i32, %c0_i32_0 : i32, i32
  }
  func.func @transform_10(%arg0: i32, %arg1: memref<8xi32, #tpu.memory_space<smem>>) -> (i32, i32) {
    %c0_i32 = arith.constant 0 : i32
    %c0_i32_0 = arith.constant 0 : i32
    %c0_i32_1 = arith.constant 0 : i32
    return %c0_i32, %c0_i32_0 : i32, i32
  }
}

</mosaic_0001>

<llo_original>
// kernel: tpu_custom_call.1
$region0: #{tpu_custom_call.1}
  #allocation0 [shape = 'u32[]', space=smem, size = 0x4, offset = 0x4, fixed_abs, tag = 'smem constant byte address 0x4 - core index']
  #allocation1 [shape = 'u32[144,128]{1,0:T(1,128)}', space=vmem, size = 0x12000, scoped, tag = 'internal scratch']
  #allocation2 [shape = 'f32[8,128]{1,0:T(8,128)}', space=vmem, size = 0x1000, scoped, tag = 'scratch operand']
  #allocation3 [shape = 'f32[8,128]{1,0:T(8,128)}', space=vmem, size = 0x1000, scoped, tag = 'scratch operand']
  #allocation4 [shape = 'f32[8,1]{1,0:T(8,128)}', space=vmem, size = 0x1000, scoped, tag = 'scratch operand']
  #allocation5 [shape = 'f32[8,1]{1,0:T(8,128)}', space=vmem, size = 0x1000, scoped, tag = 'scratch operand']
  #allocation6 [shape = 's32[8]{0}', space=sflag, size = 0x20, scoped, tag = 'scratch operand']
  #allocation7 [shape = 's32[1]{0}', space=sflag, size = 0x4, scoped, tag = 'scoped memory for tpu_custom_call.1']
  #allocation8 [shape = 'u8[512]{0}', space=smem, size = 0x200, scoped, tag = 'prefetched SMEM operand 0']
  #allocation20 [shape = 's32[]', space=sflag, size = 0x4, offset = 0, fixed_abs, tag = 'sflag constant byte address 0x0 - dummy sync flag']
  #allocation21 [shape = 's32[]', space=sflag, size = 0x4, offset = 0, fixed_abs, tag = 'sflag constant byte address 0x0 - dummy sync flag']
  #allocation22 [shape = 'u32[]', space=smem, size = 0x4, offset = 0x44, fixed_abs, tag = 'smem constant byte address 0x44 - assertion arg 0']
  #allocation23 [shape = 'u32[]', space=smem, size = 0x4, offset = 0x48, fixed_abs, tag = 'smem constant byte address 0x48 - assertion arg 1']
  #allocation24 [shape = 's32[]', space=sflag, size = 0x4, offset = 0, fixed_abs, tag = 'sflag constant byte address 0x0 - dummy sync flag']
  #allocation25 [shape = 's32[]', space=sflag, size = 0x4, offset = 0, fixed_abs, tag = 'sflag constant byte address 0x0 - dummy sync flag']
  #allocation26 [shape = 's32[]', space=sflag, size = 0x4, offset = 0, fixed_abs, tag = 'sflag constant byte address 0x0 - dummy sync flag']
  #allocation27 [shape = 's32[]', space=sflag, size = 0x4, offset = 0, fixed_abs, tag = 'sflag constant byte address 0x0 - dummy sync flag']
  #allocation28 [shape = 's32[]', space=sflag, size = 0x4, offset = 0, fixed_abs, tag = 'sflag constant byte address 0x0 - dummy sync flag']
  #allocation29 [shape = 's32[]', space=sflag, size = 0x4, offset = 0, fixed_abs, tag = 'sflag constant byte address 0x0 - dummy sync flag']
  #allocation30 [shape = 's32[]', space=sflag, size = 0x4, offset = 0, fixed_abs, tag = 'sflag constant byte address 0x0 - dummy sync flag']
  #allocation31 [shape = 's32[]', space=sflag, size = 0x4, offset = 0, fixed_abs, tag = 'sflag constant byte address 0x0 - dummy sync flag']
  #allocation32 [shape = 's32[]', space=sflag, size = 0x4, offset = 0, fixed_abs, tag = 'sflag constant byte address 0x0 - dummy sync flag']
  #allocation33 [shape = 's32[]', space=sflag, size = 0x4, offset = 0, fixed_abs, tag = 'sflag constant byte address 0x0 - dummy sync flag']
  #allocation34 [shape = 's32[]', space=sflag, size = 0x4, offset = 0, fixed_abs, tag = 'sflag constant byte address 0x0 - dummy sync flag']
  #allocation35 [shape = 's32[]', space=sflag, size = 0x4, offset = 0, fixed_abs, tag = 'sflag constant byte address 0x0 - dummy sync flag']
  #allocation36 [shape = 's32[]', space=sflag, size = 0x4, offset = 0, fixed_abs, tag = 'sflag constant byte address 0x0 - dummy sync flag']
  #allocation37 [shape = 's32[]', space=sflag, size = 0x4, offset = 0, fixed_abs, tag = 'sflag constant byte address 0x0 - dummy sync flag']
  %s0 = inlined_call_operand.hbm [shape: s32[8], index: 0, kind: input, shape index: {}]
  %s1 = inlined_call_operand.hbm [shape: f32[64,128], index: 1, kind: input, shape index: {}]
  %s2 = inlined_call_operand.hbm [shape: f32[8,128], index: 2, kind: input, shape index: {}]
  %s3 = inlined_call_operand.hbm [shape: f32[128,384], index: 3, kind: input, shape index: {}]
  %s4 = inlined_call_operand.hbm [shape: f32[128,384], index: 4, kind: input, shape index: {}]
  %s5 = inlined_call_operand.vmem [shape: f32[1,384], index: 5, kind: input, shape index: {}]
  %s6 = inlined_call_operand.vmem [shape: f32[1,128], index: 6, kind: input, shape index: {}]
  %s7 = inlined_call_operand.hbm [shape: f32[128,128], index: 7, kind: input, shape index: {}]
  %s8 = inlined_call_operand.vmem [shape: f32[1,128], index: 8, kind: input, shape index: {}]
  %s9 = inlined_call_operand.hbm [shape: f32[8,128], index: 9, kind: output, shape index: {0}]
  %s10 = inlined_call_operand.vmem [shape: f32[8,1], index: 10, kind: output, shape index: {1}]
  %s11 = inlined_call_operand.hbm [shape: f32[8,128], index: 11, kind: output, shape index: {2}]
  %12 = xla_tuple %s9, %s10, %s11
  %s13 = sld [smem:[#allocation0]]
  $region110: #{tpu_custom_call.1} parent=0
    _
  %s15 = ssub.s32 1, %s13
  %s16 = scalar_select 0, %s15, %s13
  %18 = dma.hbm_to_smem %s0, 16, [#allocation8], [#allocation7]
  %19 = dma.done [#allocation7], 16
  %20 = sfence
  $region1: #{tpu_custom_call.1} parent=0
    #allocation9 [shape = 'u8[4096]{0}', space=vmem, size = 0x1000, scoped, tag = 'input window, operand 2, single buffered']
    #allocation10 [shape = 's32[1]{0}', space=sflag, size = 0x4, scoped, tag = 'scoped memory for tpu_custom_call.1']
    #allocation11 [shape = 's32[1]{0}', space=sflag, size = 0x4, scoped, tag = 'scoped memory for tpu_custom_call.1']
    #allocation12 [shape = 'u8[196608]{0}', space=vmem, size = 0x30000, scoped, tag = 'input window, operand 3, single buffered']
    #allocation13 [shape = 's32[1]{0}', space=sflag, size = 0x4, scoped, tag = 'scoped memory for tpu_custom_call.1']
    #allocation14 [shape = 'u8[196608]{0}', space=vmem, size = 0x30000, scoped, tag = 'input window, operand 4, single buffered']
    #allocation15 [shape = 'u8[65536]{0}', space=vmem, size = 0x10000, scoped, tag = 'input window, operand 7, single buffered']
    #allocation16 [shape = 's32[1]{0}', space=sflag, size = 0x4, scoped, tag = 'scoped memory for tpu_custom_call.1']
    #allocation17 [shape = 'u8[4096]{0}', space=vmem, size = 0x1000, scoped, tag = 'output window, operand 0, single buffered']
    #allocation18 [shape = 'u8[4096]{0}', space=vmem, size = 0x1000, scoped, tag = 'output window, operand 2, single buffered']
    #allocation19 [shape = 's32[1]{0}', space=sflag, size = 0x4, scoped, tag = 'scoped memory for tpu_custom_call.1']
    %21 = vsyncpa [#allocation10], 0
    %22 = vsyncpa [#allocation13], 0
    %23 = vsyncpa [#allocation16], 0
    %24 = vsyncpa [#allocation11], 0
    %25 = vsyncpa [#allocation19], 0
    // Predicated region
    $region2: #{tpu_custom_call.1} parent=1 // pred_check
      _
    $region3: #{tpu_custom_call.1} parent=1 // pred_check_branch
      %27 = sbr.rel (0) target = $region5
    $region4: #{tpu_custom_call.1} parent=1 // pred_region
      %s29 = ssub.s32 128, 128
      %30 = vsyncadd [#allocation10], %s29
      %s32 = sshll.u32 [#allocation9], 4
      %s33 = int_to_ptr.vmem [resolvable:$true] %s32
      %35 = dma.hbm_to_vmem [thread:$0]  %s2, 128, %s33, [#allocation10]
    $region5: #{tpu_custom_call.1} parent=1 // pred_fallthru
      _
    // Predicated region
    $region6: #{tpu_custom_call.1} parent=1 // pred_check
      _
    $region7: #{tpu_custom_call.1} parent=1 // pred_check_branch
      %37 = sbr.rel (0) target = $region9
    $region8: #{tpu_custom_call.1} parent=1 // pred_region
      %s39 = ssub.s32 6144, 6144
      %40 = vsyncadd [#allocation13], %s39
      %s41 = sshll.u32 [#allocation12], 4
      %s42 = int_to_ptr.vmem [resolvable:$true] %s41
      %47 = dma.hbm_to_vmem [thread:$0]  %s3, 6144, %s42, [#allocation13], 384, 384, 24
    $region9: #{tpu_custom_call.1} parent=1 // pred_fallthru
      _
    // Predicated region
    $region10: #{tpu_custom_call.1} parent=1 // pred_check
      _
    $region11: #{tpu_custom_call.1} parent=1 // pred_check_branch
      %49 = sbr.rel (0) target = $region13
    $region12: #{tpu_custom_call.1} parent=1 // pred_region
      %s51 = ssub.s32 6144, 6144
      %52 = vsyncadd [#allocation13], %s51
      %s53 = sshll.u32 [#allocation14], 4
      %s54 = int_to_ptr.vmem [resolvable:$true] %s53
      %59 = dma.hbm_to_vmem [thread:$0]  %s4, 6144, %s54, [#allocation13], 384, 384, 24
    $region13: #{tpu_custom_call.1} parent=1 // pred_fallthru
      _
    // Predicated region
    $region14: #{tpu_custom_call.1} parent=1 // pred_check
      _
    $region15: #{tpu_custom_call.1} parent=1 // pred_check_branch
      %61 = sbr.rel (0) target = $region17
    $region16: #{tpu_custom_call.1} parent=1 // pred_region
      _
    $region17: #{tpu_custom_call.1} parent=1 // pred_fallthru
      _
    // Predicated region
    $region18: #{tpu_custom_call.1} parent=1 // pred_check
      _
    $region19: #{tpu_custom_call.1} parent=1 // pred_check_branch
      %63 = sbr.rel (0) target = $region21
    $region20: #{tpu_custom_call.1} parent=1 // pred_region
      _
    $region21: #{tpu_custom_call.1} parent=1 // pred_fallthru
      _
    // Predicated region
    $region22: #{tpu_custom_call.1} parent=1 // pred_check
      _
    $region23: #{tpu_custom_call.1} parent=1 // pred_check_branch
      %65 = sbr.rel (0) target = $region25
    $region24: #{tpu_custom_call.1} parent=1 // pred_region
      %s67 = ssub.s32 2048, 2048
      %68 = vsyncadd [#allocation16], %s67
      %s69 = sshll.u32 [#allocation15], 4
      %s70 = int_to_ptr.vmem [resolvable:$true] %s69
      %75 = dma.hbm_to_vmem [thread:$0]  %s7, 2048, %s70, [#allocation16], 128, 128, 8
    $region25: #{tpu_custom_call.1} parent=1 // pred_fallthru
      _
    // Predicated region
    $region26: #{tpu_custom_call.1} parent=1 // pred_check
      _
    $region27: #{tpu_custom_call.1} parent=1 // pred_check_branch
      %77 = sbr.rel (0) target = $region29
    $region28: #{tpu_custom_call.1} parent=1 // pred_region
      _
    $region29: #{tpu_custom_call.1} parent=1 // pred_fallthru
      _
    // Predicated region
    $region30: #{tpu_custom_call.1} parent=1 // pred_check
      _
    $region31: #{tpu_custom_call.1} parent=1 // pred_check_branch
      %79 = sbr.rel (0) target = $region33
    $region32: #{tpu_custom_call.1} parent=1 // pred_region
      %80 = dma.done [#allocation10], 128
    $region33: #{tpu_custom_call.1} parent=1 // pred_fallthru
      _
    // Predicated region
    $region34: #{tpu_custom_call.1} parent=1 // pred_check
      _
    $region35: #{tpu_custom_call.1} parent=1 // pred_check_branch
      %82 = sbr.rel (0) target = $region37
    $region36: #{tpu_custom_call.1} parent=1 // pred_region
      %83 = dma.done [#allocation13], 6144
    $region37: #{tpu_custom_call.1} parent=1 // pred_fallthru
      _
    // Predicated region
    $region38: #{tpu_custom_call.1} parent=1 // pred_check
      _
    $region39: #{tpu_custom_call.1} parent=1 // pred_check_branch
      %85 = sbr.rel (0) target = $region41
    $region40: #{tpu_custom_call.1} parent=1 // pred_region
      %86 = dma.done [#allocation13], 6144
    $region41: #{tpu_custom_call.1} parent=1 // pred_fallthru
      _
    // Predicated region
    $region42: #{tpu_custom_call.1} parent=1 // pred_check
      _
    $region43: #{tpu_custom_call.1} parent=1 // pred_check_branch
      %88 = sbr.rel (0) target = $region45
    $region44: #{tpu_custom_call.1} parent=1 // pred_region
      %89 = dma.done [#allocation16], 2048
    $region45: #{tpu_custom_call.1} parent=1 // pred_fallthru
      _
    %p90 = scmp.eq.s32.totalorder 0, 0
    // Predicated region
    $region46: #{tpu_custom_call.1} parent=1 // pred_check
      %p91 = pneg %p90
    $region47: #{tpu_custom_call.1} parent=1 // pred_check_branch
      %93 = sbr.rel (%p91) target = $region49
    $region48: #{tpu_custom_call.1} parent=1 // pred_region
      %s94 = sld [smem:[#allocation8]]
      %s95 = smul.addr %s94, 16
      %s96 = scalar_lea.hbm %s1, %s95
      // Predicated region
      $region50: #{tpu_custom_call.1} parent=48 // pred_check
        _
      $region51: #{tpu_custom_call.1} parent=48 // pred_check_branch
        %98 = sbr.rel target = $region53
      $region52: #{tpu_custom_call.1} parent=48 // pred_region
        %99 = sst [smem:[#allocation22]] [#allocation21]
        %100 = sst [smem:[#allocation23]] [#allocation20]
      $region53: #{tpu_custom_call.1} parent=48 // pred_fallthru
        _
      %102 = shalt.err (0)
      %s104 = sshll.u32 [#allocation2], 4
      %s105 = int_to_ptr.vmem [resolvable:$true] %s104
      %107 = dma.hbm_to_vmem [thread:$0]  %s96, 16, %s105, [#allocation6]
      %s108 = sld [smem:[#allocation8 + $0x1]]
      %s109 = smul.addr %s108, 16
      %s110 = scalar_lea.hbm %s1, %s109
      %s111 = scalar_lea.vmem [#allocation2], 1
      %s112 = scalar_lea.sflag [#allocation6], 1
      // Predicated region
      $region54: #{tpu_custom_call.1} parent=48 // pred_check
        _
      $region55: #{tpu_custom_call.1} parent=48 // pred_check_branch
        %114 = sbr.rel target = $region57
      $region56: #{tpu_custom_call.1} parent=48 // pred_region
        %115 = sst [smem:[#allocation22]] [#allocation25]
        %116 = sst [smem:[#allocation23]] [#allocation24]
      $region57: #{tpu_custom_call.1} parent=48 // pred_fallthru
        _
      %118 = shalt.err (0)
      %s120 = sshll.u32 %s111, 4
      %s121 = int_to_ptr.vmem [resolvable:$true] %s120
      %123 = dma.hbm_to_vmem [thread:$0]  %s110, 16, %s121, %s112
      %s124 = sld [smem:[#allocation8 + $0x2]]
      %s125 = smul.addr %s124, 16
      %s126 = scalar_lea.hbm %s1, %s125
      %s127 = scalar_lea.vmem [#allocation2], 2
      %s128 = scalar_lea.sflag [#allocation6], 2
      // Predicated region
      $region58: #{tpu_custom_call.1} parent=48 // pred_check
        _
      $region59: #{tpu_custom_call.1} parent=48 // pred_check_branch
        %130 = sbr.rel target = $region61
      $region60: #{tpu_custom_call.1} parent=48 // pred_region
        %131 = sst [smem:[#allocation22]] [#allocation27]
        %132 = sst [smem:[#allocation23]] [#allocation26]
      $region61: #{tpu_custom_call.1} parent=48 // pred_fallthru
        _
      %134 = shalt.err (0)
      %s136 = sshll.u32 %s127, 4
      %s137 = int_to_ptr.vmem [resolvable:$true] %s136
      %139 = dma.hbm_to_vmem [thread:$0]  %s126, 16, %s137, %s128
      %s140 = sld [smem:[#allocation8 + $0x3]]
      %s141 = smul.addr %s140, 16
      %s142 = scalar_lea.hbm %s1, %s141
      %s143 = scalar_lea.vmem [#allocation2], 3
      %s144 = scalar_lea.sflag [#allocation6], 3
      // Predicated region
      $region62: #{tpu_custom_call.1} parent=48 // pred_check
        _
      $region63: #{tpu_custom_call.1} parent=48 // pred_check_branch
        %146 = sbr.rel target = $region65
      $region64: #{tpu_custom_call.1} parent=48 // pred_region
        %147 = sst [smem:[#allocation22]] [#allocation29]
        %148 = sst [smem:[#allocation23]] [#allocation28]
      $region65: #{tpu_custom_call.1} parent=48 // pred_fallthru
        _
      %150 = shalt.err (0)
      %s152 = sshll.u32 %s143, 4
      %s153 = int_to_ptr.vmem [resolvable:$true] %s152
      %155 = dma.hbm_to_vmem [thread:$0]  %s142, 16, %s153, %s144
      %s156 = sld [smem:[#allocation8 + $0x4]]
      %s157 = smul.addr %s156, 16
      %s158 = scalar_lea.hbm %s1, %s157
      %s159 = scalar_lea.vmem [#allocation2], 4
      %s160 = scalar_lea.sflag [#allocation6], 4
      // Predicated region
      $region66: #{tpu_custom_call.1} parent=48 // pred_check
        _
      $region67: #{tpu_custom_call.1} parent=48 // pred_check_branch
        %162 = sbr.rel target = $region69
      $region68: #{tpu_custom_call.1} parent=48 // pred_region
        %163 = sst [smem:[#allocation22]] [#allocation31]
        %164 = sst [smem:[#allocation23]] [#allocation30]
      $region69: #{tpu_custom_call.1} parent=48 // pred_fallthru
        _
      %166 = shalt.err (0)
      %s168 = sshll.u32 %s159, 4
      %s169 = int_to_ptr.vmem [resolvable:$true] %s168
      %171 = dma.hbm_to_vmem [thread:$0]  %s158, 16, %s169, %s160
      %s172 = sld [smem:[#allocation8 + $0x5]]
      %s173 = smul.addr %s172, 16
      %s174 = scalar_lea.hbm %s1, %s173
      %s175 = scalar_lea.vmem [#allocation2], 5
      %s176 = scalar_lea.sflag [#allocation6], 5
      // Predicated region
      $region70: #{tpu_custom_call.1} parent=48 // pred_check
        _
      $region71: #{tpu_custom_call.1} parent=48 // pred_check_branch
        %178 = sbr.rel target = $region73
      $region72: #{tpu_custom_call.1} parent=48 // pred_region
        %179 = sst [smem:[#allocation22]] [#allocation33]
        %180 = sst [smem:[#allocation23]] [#allocation32]
      $region73: #{tpu_custom_call.1} parent=48 // pred_fallthru
        _
      %182 = shalt.err (0)
      %s184 = sshll.u32 %s175, 4
      %s185 = int_to_ptr.vmem [resolvable:$true] %s184
      %187 = dma.hbm_to_vmem [thread:$0]  %s174, 16, %s185, %s176
      %s188 = sld [smem:[#allocation8 + $0x6]]
      %s189 = smul.addr %s188, 16
      %s190 = scalar_lea.hbm %s1, %s189
      %s191 = scalar_lea.vmem [#allocation2], 6
      %s192 = scalar_lea.sflag [#allocation6], 6
      // Predicated region
      $region74: #{tpu_custom_call.1} parent=48 // pred_check
        _
      $region75: #{tpu_custom_call.1} parent=48 // pred_check_branch
        %194 = sbr.rel target = $region77
      $region76: #{tpu_custom_call.1} parent=48 // pred_region
        %195 = sst [smem:[#allocation22]] [#allocation35]
        %196 = sst [smem:[#allocation23]] [#allocation34]
      $region77: #{tpu_custom_call.1} parent=48 // pred_fallthru
        _
      %198 = shalt.err (0)
      %s200 = sshll.u32 %s191, 4
      %s201 = int_to_ptr.vmem [resolvable:$true] %s200
      %203 = dma.hbm_to_vmem [thread:$0]  %s190, 16, %s201, %s192
      %s204 = sld [smem:[#allocation8 + $0x7]]
      %s205 = smul.addr %s204, 16
      %s206 = scalar_lea.hbm %s1, %s205
      %s207 = scalar_lea.vmem [#allocation2], 7
      %s208 = scalar_lea.sflag [#allocation6], 7
      // Predicated region
      $region78: #{tpu_custom_call.1} parent=48 // pred_check
        _
      $region79: #{tpu_custom_call.1} parent=48 // pred_check_branch
        %210 = sbr.rel target = $region81
      $region80: #{tpu_custom_call.1} parent=48 // pred_region
        %211 = sst [smem:[#allocation22]] [#allocation37]
        %212 = sst [smem:[#allocation23]] [#allocation36]
      $region81: #{tpu_custom_call.1} parent=48 // pred_fallthru
        _
      %214 = shalt.err (0)
      %s216 = sshll.u32 %s207, 4
      %s217 = int_to_ptr.vmem [resolvable:$true] %s216
      %219 = dma.hbm_to_vmem [thread:$0]  %s206, 16, %s217, %s208
      %s220 = smul.u32 1, 1
      %s221 = sshll.u32 %s220, 4
      %222 = dma.done [#allocation6], %s221
      %s223 = sshll.u32 %s220, 4
      %224 = dma.done %s112, %s223
      %s225 = sshll.u32 %s220, 4
      %226 = dma.done %s128, %s225
      %s227 = sshll.u32 %s220, 4
      %228 = dma.done %s144, %s227
      %s229 = sshll.u32 %s220, 4
      %230 = dma.done %s160, %s229
      %s231 = sshll.u32 %s220, 4
      %232 = dma.done %s176, %s231
      %s233 = sshll.u32 %s220, 4
      %234 = dma.done %s192, %s233
      %s235 = sshll.u32 %s220, 4
      %236 = dma.done %s208, %s235
      %v237 = vld [vmem:[#allocation2] sm:$0xff]
      %v238 = vmax.f32 %v237, 0.0
      %v239 = vld [vmem:[#allocation9] sm:$0xff]
      %v240 = vld [vmem:[#allocation12] sm:$0xff]
      %v241 = vld [vmem:[#allocation12 + $0x8] sm:$0xff]
      %v242 = vld [vmem:[#allocation12 + $0x10] sm:$0xff]
      %v243 = vld [vmem:[#allocation12 + $0x18] sm:$0xff]
      %v244 = vld [vmem:[#allocation12 + $0x20] sm:$0xff]
      %v245 = vld [vmem:[#allocation12 + $0x28] sm:$0xff]
      %v246 = vld [vmem:[#allocation12 + $0x30] sm:$0xff]
      %v247 = vld [vmem:[#allocation12 + $0x38] sm:$0xff]
      %v248 = vld [vmem:[#allocation12 + $0x40] sm:$0xff]
      %v249 = vld [vmem:[#allocation12 + $0x48] sm:$0xff]
      %v250 = vld [vmem:[#allocation12 + $0x50] sm:$0xff]
      %v251 = vld [vmem:[#allocation12 + $0x58] sm:$0xff]
      %v252 = vld [vmem:[#allocation12 + $0x60] sm:$0xff]
      %v253 = vld [vmem:[#allocation12 + $0x68] sm:$0xff]
      %v254 = vld [vmem:[#allocation12 + $0x70] sm:$0xff]
      %v255 = vld [vmem:[#allocation12 + $0x78] sm:$0xff]
      %v256 = vld [vmem:[#allocation12 + $0x80] sm:$0xff]
      %v257 = vld [vmem:[#allocation12 + $0x88] sm:$0xff]
      %v258 = vld [vmem:[#allocation12 + $0x90] sm:$0xff]
      %v259 = vld [vmem:[#allocation12 + $0x98] sm:$0xff]
      %v260 = vld [vmem:[#allocation12 + $0xa0] sm:$0xff]
      %v261 = vld [vmem:[#allocation12 + $0xa8] sm:$0xff]
      %v262 = vld [vmem:[#allocation12 + $0xb0] sm:$0xff]
      %v263 = vld [vmem:[#allocation12 + $0xb8] sm:$0xff]
      %v264 = vld [vmem:[#allocation12 + $0xc0] sm:$0xff]
      %v265 = vld [vmem:[#allocation12 + $0xc8] sm:$0xff]
      %v266 = vld [vmem:[#allocation12 + $0xd0] sm:$0xff]
      %v267 = vld [vmem:[#allocation12 + $0xd8] sm:$0xff]
      %v268 = vld [vmem:[#allocation12 + $0xe0] sm:$0xff]
      %v269 = vld [vmem:[#allocation12 + $0xe8] sm:$0xff]
      %v270 = vld [vmem:[#allocation12 + $0xf0] sm:$0xff]
      %v271 = vld [vmem:[#allocation12 + $0xf8] sm:$0xff]
      %v272 = vld [vmem:[#allocation12 + $0x100] sm:$0xff]
      %v273 = vld [vmem:[#allocation12 + $0x108] sm:$0xff]
      %v274 = vld [vmem:[#allocation12 + $0x110] sm:$0xff]
      %v275 = vld [vmem:[#allocation12 + $0x118] sm:$0xff]
      %v276 = vld [vmem:[#allocation12 + $0x120] sm:$0xff]
      %v277 = vld [vmem:[#allocation12 + $0x128] sm:$0xff]
      %v278 = vld [vmem:[#allocation12 + $0x130] sm:$0xff]
      %v279 = vld [vmem:[#allocation12 + $0x138] sm:$0xff]
      %v280 = vld [vmem:[#allocation12 + $0x140] sm:$0xff]
      %v281 = vld [vmem:[#allocation12 + $0x148] sm:$0xff]
      %v282 = vld [vmem:[#allocation12 + $0x150] sm:$0xff]
      %v283 = vld [vmem:[#allocation12 + $0x158] sm:$0xff]
      %v284 = vld [vmem:[#allocation12 + $0x160] sm:$0xff]
      %v285 = vld [vmem:[#allocation12 + $0x168] sm:$0xff]
      %v286 = vld [vmem:[#allocation12 + $0x170] sm:$0xff]
      %v287 = vld [vmem:[#allocation12 + $0x178] sm:$0xff]
      %v288 = vld [vmem:[%s5] sm:$0x7]
      %v290 = vlaneseq
      %v291 = vshrl.u32 %v290, 7
      %v292 = vsub.s32 0, %v291
      %v293 = vrot.slane %v288, %v292
      %v294 = vlaneseq
      %v295 = vshrl.u32 %v294, 7
      %v296 = vsub.s32 1, %v295
      %v297 = vrot.slane %v288, %v296
      %v298 = vlaneseq
      %v299 = vshrl.u32 %v298, 7
      %v300 = vsub.s32 2, %v299
      %v301 = vrot.slane %v288, %v300
      %305 = vmatprep.subr.mxu0 %v241
      %306 = vmatpush1.msra.mxu0 %v240
      %307 = vmatprep.subr.mxu0 %v244
      %308 = vmatpush1.msra.mxu0 %v243
      %309 = vmatprep.subr.mxu0 %v247
      %310 = vmatpush1.msra.mxu0 %v246
      %311 = vmatprep.subr.mxu0 %v250
      %312 = vmatpush1.msra.mxu0 %v249
      %313 = vmatprep.subr.mxu0 %v253
      %314 = vmatpush1.msra.mxu0 %v252
      %315 = vmatprep.subr.mxu0 %v256
      %316 = vmatpush1.msra.mxu0 %v255
      %317 = vmatprep.subr.mxu0 %v259
      %318 = vmatpush1.msra.mxu0 %v258
      %319 = vmatprep.subr.mxu0 %v262
      %320 = vmatpush1.msra.mxu0 %v261
      %321 = vmatprep.subr.mxu0 %v265
      %322 = vmatpush1.msra.mxu0 %v264
      %323 = vmatprep.subr.mxu0 %v268
      %324 = vmatpush1.msra.mxu0 %v267
      %325 = vmatprep.subr.mxu0 %v271
      %326 = vmatpush1.msra.mxu0 %v270
      %327 = vmatprep.subr.mxu0 %v274
      %328 = vmatpush1.msra.mxu0 %v273
      %329 = vmatprep.subr.mxu0 %v277
      %330 = vmatpush1.msra.mxu0 %v276
      %331 = vmatprep.subr.mxu0 %v280
      %332 = vmatpush1.msra.mxu0 %v279
      %333 = vmatprep.subr.mxu0 %v283
      %334 = vmatpush1.msra.mxu0 %v282
      %335 = vmatprep.subr.mxu0 %v286
      %336 = vmatpush1.msra.mxu0 %v285
      %337 = vmatprep.subr.mxu0 0.0
      %338 = vmatpush1.msra.mxu0 0.0
      %339 = vmatprep.subr.mxu0 0.0
      %340 = vmatpush1.msra.mxu0 0.0
      %341 = vmatprep.subr.mxu0 0.0
      %342 = vmatpush1.msra.mxu0 0.0
      %343 = vmatprep.subr.mxu0 0.0
      %344 = vmatpush1.msra.mxu0 0.0
      %345 = vmatprep.subr.mxu0 0.0
      %346 = vmatpush1.msra.mxu0 0.0
      %347 = vmatprep.subr.mxu0 0.0
      %348 = vmatpush1.msra.mxu0 0.0
      %349 = vmatprep.subr.mxu0 0.0
      %350 = vmatpush1.msra.mxu0 0.0
      %351 = vmatprep.subr.mxu0 0.0
      %352 = vmatpush1.msra.mxu0 0.0
      %353 = vmatprep.subr.mxu0 0.0
      %354 = vmatpush1.msra.mxu0 0.0
      %355 = vmatprep.subr.mxu0 0.0
      %356 = vmatpush1.msra.mxu0 0.0
      %357 = vmatprep.subr.mxu0 0.0
      %358 = vmatpush1.msra.mxu0 0.0
      %359 = vmatprep.subr.mxu0 0.0
      %360 = vmatpush1.msra.mxu0 0.0
      %361 = vmatprep.subr.mxu0 0.0
      %362 = vmatpush1.msra.mxu0 0.0
      %363 = vmatprep.subr.mxu0 0.0
      %364 = vmatpush1.msra.mxu0 0.0
      %365 = vmatprep.subr.mxu0 0.0
      %366 = vmatpush1.msra.mxu0 0.0
      %367 = vmatprep.subr.mxu0 0.0
      %368 = vmatpush1.msra.mxu0 0.0
      %369 = vmatprep.mubr.f32.mxu0 0.0
      %370 = vmatmul.mubr.f32.gmra.mrb[0].mxu0 %v238
      %v371 = vpop.f32.mrb[0].mxu0
      %v372 = vadd.f32 %v293, %v371
      %v373 = vpop.f32.mrb[0].mxu0
      %v374 = vadd.f32 %v297, %v373
      %375 = vdwg.mxu0
      %376 = vmatprep.subr.mxu0 0.0
      %377 = vmatpush1.msra.mxu0 %v242
      %378 = vmatprep.subr.mxu0 0.0
      %379 = vmatpush1.msra.mxu0 %v245
      %380 = vmatprep.subr.mxu0 0.0
      %381 = vmatpush1.msra.mxu0 %v248
      %382 = vmatprep.subr.mxu0 0.0
      %383 = vmatpush1.msra.mxu0 %v251
      %384 = vmatprep.subr.mxu0 0.0
      %385 = vmatpush1.msra.mxu0 %v254
      %386 = vmatprep.subr.mxu0 0.0
      %387 = vmatpush1.msra.mxu0 %v257
      %388 = vmatprep.subr.mxu0 0.0
      %389 = vmatpush1.msra.mxu0 %v260
      %390 = vmatprep.subr.mxu0 0.0
      %391 = vmatpush1.msra.mxu0 %v263
      %392 = vmatprep.subr.mxu0 0.0
      %393 = vmatpush1.msra.mxu0 %v266
      %394 = vmatprep.subr.mxu0 0.0
      %395 = vmatpush1.msra.mxu0 %v269
      %396 = vmatprep.subr.mxu0 0.0
      %397 = vmatpush1.msra.mxu0 %v272
      %398 = vmatprep.subr.mxu0 0.0
      %399 = vmatpush1.msra.mxu0 %v275
      %400 = vmatprep.subr.mxu0 0.0
      %401 = vmatpush1.msra.mxu0 %v278
      %402 = vmatprep.subr.mxu0 0.0
      %403 = vmatpush1.msra.mxu0 %v281
      %404 = vmatprep.subr.mxu0 0.0
      %405 = vmatpush1.msra.mxu0 %v284
      %406 = vmatprep.subr.mxu0 0.0
      %407 = vmatpush1.msra.mxu0 %v287
      %408 = vmatprep.subr.mxu0 0.0
      %409 = vmatpush1.msra.mxu0 0.0
      %410 = vmatprep.subr.mxu0 0.0
      %411 = vmatpush1.msra.mxu0 0.0
      %412 = vmatprep.subr.mxu0 0.0
      %413 = vmatpush1.msra.mxu0 0.0
      %414 = vmatprep.subr.mxu0 0.0
      %415 = vmatpush1.msra.mxu0 0.0
      %416 = vmatprep.subr.mxu0 0.0
      %417 = vmatpush1.msra.mxu0 0.0
      %418 = vmatprep.subr.mxu0 0.0
      %419 = vmatpush1.msra.mxu0 0.0
      %420 = vmatprep.subr.mxu0 0.0
      %421 = vmatpush1.msra.mxu0 0.0
      %422 = vmatprep.subr.mxu0 0.0
      %423 = vmatpush1.msra.mxu0 0.0
      %424 = vmatprep.subr.mxu0 0.0
      %425 = vmatpush1.msra.mxu0 0.0
      %426 = vmatprep.subr.mxu0 0.0
      %427 = vmatpush1.msra.mxu0 0.0
      %428 = vmatprep.subr.mxu0 0.0
      %429 = vmatpush1.msra.mxu0 0.0
      %430 = vmatprep.subr.mxu0 0.0
      %431 = vmatpush1.msra.mxu0 0.0
      %432 = vmatprep.subr.mxu0 0.0
      %433 = vmatpush1.msra.mxu0 0.0
      %434 = vmatprep.subr.mxu0 0.0
      %435 = vmatpush1.msra.mxu0 0.0
      %436 = vmatprep.subr.mxu0 0.0
      %437 = vmatpush1.msra.mxu0 0.0
      %438 = vmatprep.subr.mxu0 0.0
      %439 = vmatpush1.msra.mxu0 0.0
      %440 = vmatprep.mubr.f32.mxu0 0.0
      %441 = vmatmul.mubr.f32.gmra.mrb[0].mxu0 %v238
      %v442 = vpop.f32.mrb[0].mxu0
      %v443 = vadd.f32 %v301, %v442
      %v444 = vpop.f32.mrb[0].mxu0
      %445 = vdwg.mxu0
      %v446 = vld [vmem:[#allocation14] sm:$0xff]
      %v447 = vld [vmem:[#allocation14 + $0x8] sm:$0xff]
      %v448 = vld [vmem:[#allocation14 + $0x10] sm:$0xff]
      %v449 = vld [vmem:[#allocation14 + $0x18] sm:$0xff]
      %v450 = vld [vmem:[#allocation14 + $0x20] sm:$0xff]
      %v451 = vld [vmem:[#allocation14 + $0x28] sm:$0xff]
      %v452 = vld [vmem:[#allocation14 + $0x30] sm:$0xff]
      %v453 = vld [vmem:[#allocation14 + $0x38] sm:$0xff]
      %v454 = vld [vmem:[#allocation14 + $0x40] sm:$0xff]
      %v455 = vld [vmem:[#allocation14 + $0x48] sm:$0xff]
      %v456 = vld [vmem:[#allocation14 + $0x50] sm:$0xff]
      %v457 = vld [vmem:[#allocation14 + $0x58] sm:$0xff]
      %v458 = vld [vmem:[#allocation14 + $0x60] sm:$0xff]
      %v459 = vld [vmem:[#allocation14 + $0x68] sm:$0xff]
      %v460 = vld [vmem:[#allocation14 + $0x70] sm:$0xff]
      %v461 = vld [vmem:[#allocation14 + $0x78] sm:$0xff]
      %v462 = vld [vmem:[#allocation14 + $0x80] sm:$0xff]
      %v463 = vld [vmem:[#allocation14 + $0x88] sm:$0xff]
      %v464 = vld [vmem:[#allocation14 + $0x90] sm:$0xff]
      %v465 = vld [vmem:[#allocation14 + $0x98] sm:$0xff]
      %v466 = vld [vmem:[#allocation14 + $0xa0] sm:$0xff]
      %v467 = vld [vmem:[#allocation14 + $0xa8] sm:$0xff]
      %v468 = vld [vmem:[#allocation14 + $0xb0] sm:$0xff]
      %v469 = vld [vmem:[#allocation14 + $0xb8] sm:$0xff]
      %v470 = vld [vmem:[#allocation14 + $0xc0] sm:$0xff]
      %v471 = vld [vmem:[#allocation14 + $0xc8] sm:$0xff]
      %v472 = vld [vmem:[#allocation14 + $0xd0] sm:$0xff]
      %v473 = vld [vmem:[#allocation14 + $0xd8] sm:$0xff]
      %v474 = vld [vmem:[#allocation14 + $0xe0] sm:$0xff]
      %v475 = vld [vmem:[#allocation14 + $0xe8] sm:$0xff]
      %v476 = vld [vmem:[#allocation14 + $0xf0] sm:$0xff]
      %v477 = vld [vmem:[#allocation14 + $0xf8] sm:$0xff]
      %v478 = vld [vmem:[#allocation14 + $0x100] sm:$0xff]
      %v479 = vld [vmem:[#allocation14 + $0x108] sm:$0xff]
      %v480 = vld [vmem:[#allocation14 + $0x110] sm:$0xff]
      %v481 = vld [vmem:[#allocation14 + $0x118] sm:$0xff]
      %v482 = vld [vmem:[#allocation14 + $0x120] sm:$0xff]
      %v483 = vld [vmem:[#allocation14 + $0x128] sm:$0xff]
      %v484 = vld [vmem:[#allocation14 + $0x130] sm:$0xff]
      %v485 = vld [vmem:[#allocation14 + $0x138] sm:$0xff]
      %v486 = vld [vmem:[#allocation14 + $0x140] sm:$0xff]
      %v487 = vld [vmem:[#allocation14 + $0x148] sm:$0xff]
      %v488 = vld [vmem:[#allocation14 + $0x150] sm:$0xff]
      %v489 = vld [vmem:[#allocation14 + $0x158] sm:$0xff]
      %v490 = vld [vmem:[#allocation14 + $0x160] sm:$0xff]
      %v491 = vld [vmem:[#allocation14 + $0x168] sm:$0xff]
      %v492 = vld [vmem:[#allocation14 + $0x170] sm:$0xff]
      %v493 = vld [vmem:[#allocation14 + $0x178] sm:$0xff]
      %494 = vmatprep.subr.mxu0 %v447
      %495 = vmatpush1.msra.mxu0 %v446
      %496 = vmatprep.subr.mxu0 %v450
      %497 = vmatpush1.msra.mxu0 %v449
      %498 = vmatprep.subr.mxu0 %v453
      %499 = vmatpush1.msra.mxu0 %v452
      %500 = vmatprep.subr.mxu0 %v456
      %501 = vmatpush1.msra.mxu0 %v455
      %502 = vmatprep.subr.mxu0 %v459
      %503 = vmatpush1.msra.mxu0 %v458
      %504 = vmatprep.subr.mxu0 %v462
      %505 = vmatpush1.msra.mxu0 %v461
      %506 = vmatprep.subr.mxu0 %v465
      %507 = vmatpush1.msra.mxu0 %v464
      %508 = vmatprep.subr.mxu0 %v468
      %509 = vmatpush1.msra.mxu0 %v467
      %510 = vmatprep.subr.mxu0 %v471
      %511 = vmatpush1.msra.mxu0 %v470
      %512 = vmatprep.subr.mxu0 %v474
      %513 = vmatpush1.msra.mxu0 %v473
      %514 = vmatprep.subr.mxu0 %v477
      %515 = vmatpush1.msra.mxu0 %v476
      %516 = vmatprep.subr.mxu0 %v480
      %517 = vmatpush1.msra.mxu0 %v479
      %518 = vmatprep.subr.mxu0 %v483
      %519 = vmatpush1.msra.mxu0 %v482
      %520 = vmatprep.subr.mxu0 %v486
      %521 = vmatpush1.msra.mxu0 %v485
      %522 = vmatprep.subr.mxu0 %v489
      %523 = vmatpush1.msra.mxu0 %v488
      %524 = vmatprep.subr.mxu0 %v492
      %525 = vmatpush1.msra.mxu0 %v491
      %526 = vmatprep.subr.mxu0 0.0
      %527 = vmatpush1.msra.mxu0 0.0
      %528 = vmatprep.subr.mxu0 0.0
      %529 = vmatpush1.msra.mxu0 0.0
      %530 = vmatprep.subr.mxu0 0.0
      %531 = vmatpush1.msra.mxu0 0.0
      %532 = vmatprep.subr.mxu0 0.0
      %533 = vmatpush1.msra.mxu0 0.0
      %534 = vmatprep.subr.mxu0 0.0
      %535 = vmatpush1.msra.mxu0 0.0
      %536 = vmatprep.subr.mxu0 0.0
      %537 = vmatpush1.msra.mxu0 0.0
      %538 = vmatprep.subr.mxu0 0.0
      %539 = vmatpush1.msra.mxu0 0.0
      %540 = vmatprep.subr.mxu0 0.0
      %541 = vmatpush1.msra.mxu0 0.0
      %542 = vmatprep.subr.mxu0 0.0
      %543 = vmatpush1.msra.mxu0 0.0
      %544 = vmatprep.subr.mxu0 0.0
      %545 = vmatpush1.msra.mxu0 0.0
      %546 = vmatprep.subr.mxu0 0.0
      %547 = vmatpush1.msra.mxu0 0.0
      %548 = vmatprep.subr.mxu0 0.0
      %549 = vmatpush1.msra.mxu0 0.0
      %550 = vmatprep.subr.mxu0 0.0
      %551 = vmatpush1.msra.mxu0 0.0
      %552 = vmatprep.subr.mxu0 0.0
      %553 = vmatpush1.msra.mxu0 0.0
      %554 = vmatprep.subr.mxu0 0.0
      %555 = vmatpush1.msra.mxu0 0.0
      %556 = vmatprep.subr.mxu0 0.0
      %557 = vmatpush1.msra.mxu0 0.0
      %558 = vmatprep.mubr.f32.mxu0 0.0
      %559 = vmatmul.mubr.f32.gmra.mrb[0].mxu0 %v239
      %v560 = vpop.f32.mrb[0].mxu0
      %v561 = vadd.f32 0.0, %v560
      %v562 = vpop.f32.mrb[0].mxu0
      %v563 = vadd.f32 0.0, %v562
      %564 = vdwg.mxu0
      %565 = vmatprep.subr.mxu0 0.0
      %566 = vmatpush1.msra.mxu0 %v448
      %567 = vmatprep.subr.mxu0 0.0
      %568 = vmatpush1.msra.mxu0 %v451
      %569 = vmatprep.subr.mxu0 0.0
      %570 = vmatpush1.msra.mxu0 %v454
      %571 = vmatprep.subr.mxu0 0.0
      %572 = vmatpush1.msra.mxu0 %v457
      %573 = vmatprep.subr.mxu0 0.0
      %574 = vmatpush1.msra.mxu0 %v460
      %575 = vmatprep.subr.mxu0 0.0
      %576 = vmatpush1.msra.mxu0 %v463
      %577 = vmatprep.subr.mxu0 0.0
      %578 = vmatpush1.msra.mxu0 %v466
      %579 = vmatprep.subr.mxu0 0.0
      %580 = vmatpush1.msra.mxu0 %v469
      %581 = vmatprep.subr.mxu0 0.0
      %582 = vmatpush1.msra.mxu0 %v472
      %583 = vmatprep.subr.mxu0 0.0
      %584 = vmatpush1.msra.mxu0 %v475
      %585 = vmatprep.subr.mxu0 0.0
      %586 = vmatpush1.msra.mxu0 %v478
      %587 = vmatprep.subr.mxu0 0.0
      %588 = vmatpush1.msra.mxu0 %v481
      %589 = vmatprep.subr.mxu0 0.0
      %590 = vmatpush1.msra.mxu0 %v484
      %591 = vmatprep.subr.mxu0 0.0
      %592 = vmatpush1.msra.mxu0 %v487
      %593 = vmatprep.subr.mxu0 0.0
      %594 = vmatpush1.msra.mxu0 %v490
      %595 = vmatprep.subr.mxu0 0.0
      %596 = vmatpush1.msra.mxu0 %v493
      %597 = vmatprep.subr.mxu0 0.0
      %598 = vmatpush1.msra.mxu0 0.0
      %599 = vmatprep.subr.mxu0 0.0
      %600 = vmatpush1.msra.mxu0 0.0
      %601 = vmatprep.subr.mxu0 0.0
      %602 = vmatpush1.msra.mxu0 0.0
      %603 = vmatprep.subr.mxu0 0.0
      %604 = vmatpush1.msra.mxu0 0.0
      %605 = vmatprep.subr.mxu0 0.0
      %606 = vmatpush1.msra.mxu0 0.0
      %607 = vmatprep.subr.mxu0 0.0
      %608 = vmatpush1.msra.mxu0 0.0
      %609 = vmatprep.subr.mxu0 0.0
      %610 = vmatpush1.msra.mxu0 0.0
      %611 = vmatprep.subr.mxu0 0.0
      %612 = vmatpush1.msra.mxu0 0.0
      %613 = vmatprep.subr.mxu0 0.0
      %614 = vmatpush1.msra.mxu0 0.0
      %615 = vmatprep.subr.mxu0 0.0
      %616 = vmatpush1.msra.mxu0 0.0
      %617 = vmatprep.subr.mxu0 0.0
      %618 = vmatpush1.msra.mxu0 0.0
      %619 = vmatprep.subr.mxu0 0.0
      %620 = vmatpush1.msra.mxu0 0.0
      %621 = vmatprep.subr.mxu0 0.0
      %622 = vmatpush1.msra.mxu0 0.0
      %623 = vmatprep.subr.mxu0 0.0
      %624 = vmatpush1.msra.mxu0 0.0
      %625 = vmatprep.subr.mxu0 0.0
      %626 = vmatpush1.msra.mxu0 0.0
      %627 = vmatprep.subr.mxu0 0.0
      %628 = vmatpush1.msra.mxu0 0.0
      %629 = vmatprep.mubr.f32.mxu0 0.0
      %630 = vmatmul.mubr.f32.gmra.mrb[0].mxu0 %v239
      %v631 = vpop.f32.mrb[0].mxu0
      %v632 = vadd.f32 0.0, %v631
      %v633 = vpop.f32.mrb[0].mxu0
      %634 = vdwg.mxu0
      %v635 = vadd.f32 %v372, %v561
      %v636 = vxor.u32 %v635, 2147483648
      %v637 = vmul.f32 %v636, 1.442695
      %v638 = vpow.pop %v637
      %v639 = vadd.f32 %v638, 1.0
      %v640 = vrcp.pop %v639
      %v641 = vmul.f32 1.0, %v640
      %v642 = vadd.f32 %v374, %v563
      %v643 = vxor.u32 %v642, 2147483648
      %v644 = vmul.f32 %v643, 1.442695
      %v645 = vpow.pop %v644
      %v646 = vadd.f32 %v645, 1.0
      %v647 = vrcp.pop %v646
      %v648 = vmul.f32 1.0, %v647
      %v649 = vld [vmem:[%s6] sm:$0x1]
      %v651 = vlaneseq
      %v652 = vshrl.u32 %v651, 7
      %v653 = vsub.s32 0, %v652
      %v654 = vrot.slane %v649, %v653
      %v656 = vadd.f32 %v632, %v654
      %v657 = vmul.f32 %v641, %v656
      %v658 = vadd.f32 %v443, %v657
      %v659 = vtanh.pop %v658
      %v660 = vsub.f32 1.0, %v648
      %v661 = vmul.f32 %v660, %v659
      %v662 = vmul.f32 %v648, %v239
      %v663 = vadd.f32 %v661, %v662
      %664 = vst [vmem:[#allocation18] sm:$0xff] %v663
      %665 = vst [vmem:[#allocation3] sm:$0xff] %v663
      %vm666 = vcmask 7168
      %667 = vst.msk [vmem:[#allocation4] sm:$0xff] %vm666, -1e+30
      %668 = vst.msk [vmem:[#allocation5] sm:$0xff] %vm666, 0.0
    $region49: #{tpu_custom_call.1} parent=1 // pred_fallthru
      _
    %v669 = vld [vmem:[#allocation3] sm:$0xff]
    %v670 = vld [vmem:[#allocation15] sm:$0xff]
    %v671 = vld [vmem:[#allocation15 + $0x8] sm:$0xff]
    %v672 = vld [vmem:[#allocation15 + $0x10] sm:$0xff]
    %v673 = vld [vmem:[#allocation15 + $0x18] sm:$0xff]
    %v674 = vld [vmem:[#allocation15 + $0x20] sm:$0xff]
    %v675 = vld [vmem:[#allocation15 + $0x28] sm:$0xff]
    %v676 = vld [vmem:[#allocation15 + $0x30] sm:$0xff]
    %v677 = vld [vmem:[#allocation15 + $0x38] sm:$0xff]
    %v678 = vld [vmem:[#allocation15 + $0x40] sm:$0xff]
    %v679 = vld [vmem:[#allocation15 + $0x48] sm:$0xff]
    %v680 = vld [vmem:[#allocation15 + $0x50] sm:$0xff]
    %v681 = vld [vmem:[#allocation15 + $0x58] sm:$0xff]
    %v682 = vld [vmem:[#allocation15 + $0x60] sm:$0xff]
    %v683 = vld [vmem:[#allocation15 + $0x68] sm:$0xff]
    %v684 = vld [vmem:[#allocation15 + $0x70] sm:$0xff]
    %v685 = vld [vmem:[#allocation15 + $0x78] sm:$0xff]
    %v686 = vld [vmem:[%s8] sm:$0x1]
    %v688 = vlaneseq
    %v689 = vshrl.u32 %v688, 7
    %v690 = vsub.s32 0, %v689
    %v691 = vrot.slane %v686, %v690
    %693 = vmatprep.subr.mxu0 0.0
    %694 = vmatpush1.msra.mxu0 %v670
    %695 = vmatprep.subr.mxu0 0.0
    %696 = vmatpush1.msra.mxu0 %v671
    %697 = vmatprep.subr.mxu0 0.0
    %698 = vmatpush1.msra.mxu0 %v672
    %699 = vmatprep.subr.mxu0 0.0
    %700 = vmatpush1.msra.mxu0 %v673
    %701 = vmatprep.subr.mxu0 0.0
    %702 = vmatpush1.msra.mxu0 %v674
    %703 = vmatprep.subr.mxu0 0.0
    %704 = vmatpush1.msra.mxu0 %v675
    %705 = vmatprep.subr.mxu0 0.0
    %706 = vmatpush1.msra.mxu0 %v676
    %707 = vmatprep.subr.mxu0 0.0
    %708 = vmatpush1.msra.mxu0 %v677
    %709 = vmatprep.subr.mxu0 0.0
    %710 = vmatpush1.msra.mxu0 %v678
    %711 = vmatprep.subr.mxu0 0.0
    %712 = vmatpush1.msra.mxu0 %v679
    %713 = vmatprep.subr.mxu0 0.0
    %714 = vmatpush1.msra.mxu0 %v680
    %715 = vmatprep.subr.mxu0 0.0
    %716 = vmatpush1.msra.mxu0 %v681
    %717 = vmatprep.subr.mxu0 0.0
    %718 = vmatpush1.msra.mxu0 %v682
    %719 = vmatprep.subr.mxu0 0.0
    %720 = vmatpush1.msra.mxu0 %v683
    %721 = vmatprep.subr.mxu0 0.0
    %722 = vmatpush1.msra.mxu0 %v684
    %723 = vmatprep.subr.mxu0 0.0
    %724 = vmatpush1.msra.mxu0 %v685
    %725 = vmatprep.subr.mxu0 0.0
    %726 = vmatpush1.msra.mxu0 0.0
    %727 = vmatprep.subr.mxu0 0.0
    %728 = vmatpush1.msra.mxu0 0.0
    %729 = vmatprep.subr.mxu0 0.0
    %730 = vmatpush1.msra.mxu0 0.0
    %731 = vmatprep.subr.mxu0 0.0
    %732 = vmatpush1.msra.mxu0 0.0
    %733 = vmatprep.subr.mxu0 0.0
    %734 = vmatpush1.msra.mxu0 0.0
    %735 = vmatprep.subr.mxu0 0.0
    %736 = vmatpush1.msra.mxu0 0.0
    %737 = vmatprep.subr.mxu0 0.0
    %738 = vmatpush1.msra.mxu0 0.0
    %739 = vmatprep.subr.mxu0 0.0
    %740 = vmatpush1.msra.mxu0 0.0
    %741 = vmatprep.subr.mxu0 0.0
    %742 = vmatpush1.msra.mxu0 0.0
    %743 = vmatprep.subr.mxu0 0.0
    %744 = vmatpush1.msra.mxu0 0.0
    %745 = vmatprep.subr.mxu0 0.0
    %746 = vmatpush1.msra.mxu0 0.0
    %747 = vmatprep.subr.mxu0 0.0
    %748 = vmatpush1.msra.mxu0 0.0
    %749 = vmatprep.subr.mxu0 0.0
    %750 = vmatpush1.msra.mxu0 0.0
    %751 = vmatprep.subr.mxu0 0.0
    %752 = vmatpush1.msra.mxu0 0.0
    %753 = vmatprep.subr.mxu0 0.0
    %754 = vmatpush1.msra.mxu0 0.0
    %755 = vmatprep.subr.mxu0 0.0
    %756 = vmatpush1.msra.mxu0 0.0
    %757 = vmatprep.mubr.f32.mxu0 0.0
    %758 = vmatmul.mubr.f32.gmra.mrb[0].mxu0 %v669
    %v759 = vpop.f32.mrb[0].mxu0
    %v760 = vadd.f32 %v691, %v759
    %v761 = vpop.f32.mrb[0].mxu0
    %762 = vdwg.mxu0
    %763 = vst [vmem:[#allocation17] sm:$0xff] %v760
    %v764 = vld [vmem:[#allocation4] sm:$0xff]
    %765 = vmax.xlane.f32.xlu0 %v760
    %v766 = vpop.xlane.xlu0 %765
    %v767 = vmax.f32 %v764, %v766
    %v768 = vld [vmem:[#allocation5] sm:$0xff]
    %v769 = vsub.f32 %v764, %v767
    %v770 = vmul.f32 %v769, 1.442695
    %v771 = vpow.pop %v770
    %v772 = vmul.f32 %v768, %v771
    %774 = vset.pattern.permute.xlu0 0
    %775 = vperm.xlu0 %774, %v767
    %v776 = vpop.permute.xlu0 %775
    %v778 = vsub.f32 %v760, %v776
    %v779 = vmul.f32 %v778, 1.442695
    %v780 = vpow.pop %v779
    %781 = vadd.xlane.f32.xlu0 %v780
    %v782 = vpop.xlane.xlu0 %781
    %v783 = vadd.f32 %v772, %v782
    %vm784 = vcmask 7168
    %785 = vst.msk [vmem:[#allocation5] sm:$0xff] %vm784, %v783
    %786 = vst.msk [vmem:[#allocation4] sm:$0xff] %vm784, %v767
    // Predicated region
    $region82: #{tpu_custom_call.1} parent=1 // pred_check
      %p787 = pneg %p90
    $region83: #{tpu_custom_call.1} parent=1 // pred_check_branch
      %789 = sbr.rel (%p787) target = $region85
    $region84: #{tpu_custom_call.1} parent=1 // pred_region
      %v790 = vld [vmem:[#allocation4] sm:$0xff]
      %v791 = vld [vmem:[#allocation5] sm:$0xff]
      %v792 = vlog2.pop %v791
      %v793 = vmul.f32 %v792, 0.6931472
      %v794 = vadd.f32 %v790, %v793
      %795 = vst.msk [vmem:[%s10] sm:$0xff] %vm784, %v794
    $region85: #{tpu_custom_call.1} parent=1 // pred_fallthru
      _
    // Predicated region
    $region86: #{tpu_custom_call.1} parent=1 // pred_check
      _
    $region87: #{tpu_custom_call.1} parent=1 // pred_check_branch
      %797 = sbr.rel (0) target = $region89
    $region88: #{tpu_custom_call.1} parent=1 // pred_region
      %s799 = ssub.s32 128, 128
      %800 = vsyncadd [#allocation11], %s799
      %s802 = sshll.u32 [#allocation17], 4
      %s803 = int_to_ptr.vmem [resolvable:$true] %s802
      %805 = dma.vmem_to_hbm [thread:$0]  %s803, 128, %s9, [#allocation11]
    $region89: #{tpu_custom_call.1} parent=1 // pred_fallthru
      _
    // Predicated region
    $region90: #{tpu_custom_call.1} parent=1 // pred_check
      _
    $region91: #{tpu_custom_call.1} parent=1 // pred_check_branch
      %807 = sbr.rel (0) target = $region93
    $region92: #{tpu_custom_call.1} parent=1 // pred_region
      _
    $region93: #{tpu_custom_call.1} parent=1 // pred_fallthru
      _
    // Predicated region
    $region94: #{tpu_custom_call.1} parent=1 // pred_check
      _
    $region95: #{tpu_custom_call.1} parent=1 // pred_check_branch
      %809 = sbr.rel (0) target = $region97
    $region96: #{tpu_custom_call.1} parent=1 // pred_region
      %s811 = ssub.s32 128, 128
      %812 = vsyncadd [#allocation19], %s811
      %s814 = sshll.u32 [#allocation18], 4
      %s815 = int_to_ptr.vmem [resolvable:$true] %s814
      %817 = dma.vmem_to_hbm [thread:$0]  %s815, 128, %s11, [#allocation19]
    $region97: #{tpu_custom_call.1} parent=1 // pred_fallthru
      _
    // Predicated region
    $region98: #{tpu_custom_call.1} parent=1 // pred_check
      _
    $region99: #{tpu_custom_call.1} parent=1 // pred_check_branch
      %819 = sbr.rel (0) target = $region101
    $region100: #{tpu_custom_call.1} parent=1 // pred_region
      %820 = dma.done [#allocation11], 128
    $region101: #{tpu_custom_call.1} parent=1 // pred_fallthru
      _
    // Predicated region
    $region102: #{tpu_custom_call.1} parent=1 // pred_check
      _
    $region103: #{tpu_custom_call.1} parent=1 // pred_check_branch
      %822 = sbr.rel (0) target = $region105
    $region104: #{tpu_custom_call.1} parent=1 // pred_region
      _
    $region105: #{tpu_custom_call.1} parent=1 // pred_fallthru
      _
    // Predicated region
    $region106: #{tpu_custom_call.1} parent=1 // pred_check
      _
    $region107: #{tpu_custom_call.1} parent=1 // pred_check_branch
      %824 = sbr.rel (0) target = $region109
    $region108: #{tpu_custom_call.1} parent=1 // pred_region
      %825 = dma.done [#allocation19], 128
    $region109: #{tpu_custom_call.1} parent=1 // pred_fallthru
      _
    %826 = vsyncpa [#allocation10], 1
    %827 = vsyncpa [#allocation13], 1
    %828 = vsyncpa [#allocation16], 1
    %829 = vsyncpa [#allocation11], 1
    %830 = vsyncpa [#allocation19], 1
  %831 = vsyncmov [#allocation6]
  %s832 = vpop.sfrf %831
  %p833 = scmp.eq.s32.totalorder %s832, 0
  %p834 = pneg %p833
  %836 = shalt.err (%p834)
  %s837 = scalar_lea.sflag [#allocation6], 1
  %838 = vsyncmov %s837
  %s839 = vpop.sfrf %838
  %p840 = scmp.eq.s32.totalorder %s839, 0
  %p841 = pneg %p840
  %843 = shalt.err (%p841)
  %s844 = scalar_lea.sflag [#allocation6], 2
  %845 = vsyncmov %s844
  %s846 = vpop.sfrf %845
  %p847 = scmp.eq.s32.totalorder %s846, 0
  %p848 = pneg %p847
  %850 = shalt.err (%p848)
  %s851 = scalar_lea.sflag [#allocation6], 3
  %852 = vsyncmov %s851
  %s853 = vpop.sfrf %852
  %p854 = scmp.eq.s32.totalorder %s853, 0
  %p855 = pneg %p854
  %857 = shalt.err (%p855)
  %s858 = scalar_lea.sflag [#allocation6], 4
  %859 = vsyncmov %s858
  %s860 = vpop.sfrf %859
  %p861 = scmp.eq.s32.totalorder %s860, 0
  %p862 = pneg %p861
  %864 = shalt.err (%p862)
  %s865 = scalar_lea.sflag [#allocation6], 5
  %866 = vsyncmov %s865
  %s867 = vpop.sfrf %866
  %p868 = scmp.eq.s32.totalorder %s867, 0
  %p869 = pneg %p868
  %871 = shalt.err (%p869)
  %s872 = scalar_lea.sflag [#allocation6], 6
  %873 = vsyncmov %s872
  %s874 = vpop.sfrf %873
  %p875 = scmp.eq.s32.totalorder %s874, 0
  %p876 = pneg %p875
  %878 = shalt.err (%p876)
  %s879 = scalar_lea.sflag [#allocation6], 7
  %880 = vsyncmov %s879
  %s881 = vpop.sfrf %880
  %p882 = scmp.eq.s32.totalorder %s881, 0
  %p883 = pneg %p882
  %885 = shalt.err (%p883)

</llo_original>
